<compile_context>
chip_gen: v5e
topology: v5e:2x2
jax: 0.10.0
libtpu: 0.0.40
codegen_flags: <defaults>
</compile_context>

<pallas_src>
import functools
import math

import jax
import jax.numpy as jnp
import numpy as np
from jax import lax
from jax.experimental import pallas as pl
from jax.experimental.pallas import tpu as pltpu

EPS = 1e-8
SPEED_OF_SOUND = 343.0


def _drone_kernel(*refs, n_harmonics: int, n_poly: int, use_basis_gain: bool,
                  eps: float, strip_t: int):
    if use_basis_gain:
        pc_ref, ehgc_ref, theta_ref, speed_ref, out_ref = refs
    else:
        ehgc_ref, theta_ref, out_ref = refs
        pc_ref = speed_ref = None

    f32 = jnp.float32
    tile_t = out_ref.shape[-1]
    n_strips = tile_t // strip_t

    def strip_body(i):
        t0 = pl.multiple_of(i * strip_t, strip_t)
        th = theta_ref[:, pl.ds(t0, strip_t)].astype(f32)
        # Base harmonic on the EUP (idle next to the ~250 VALU ops/sample below).
        s1 = jnp.sin(th)
        c2 = 2.0 * jnp.cos(th)

        if use_basis_gain:
            # PolynomialRegression(n_poly, bias=False) in Horner form: x*(c0 + x*(c1 + ...)).
            # TODO(synk): bias=True path of PolynomialRegression is unused by DroneNoiseGen
            # and therefore not implemented here.
            x = speed_ref[:, pl.ds(t0, strip_t)].astype(f32) * (1.0 / SPEED_OF_SOUND)
            poly = pc_ref[n_poly - 1]
            for k in range(n_poly - 2, -1, -1):
                poly = pc_ref[k] + x * poly
            eb = jnp.exp(x * poly)                       # exp(basis gain)

        # Chebyshev (2nd kind) sine recurrence: sin((h+1)θ) = 2cosθ·sin(hθ) − sin((h−1)θ).
        s_prev = jnp.zeros_like(s1)                      # sin(0·θ)
        s_cur = s1                                       # sin(1·θ)
        acc_g = ehgc_ref[0] * s_cur                      # Σ_h exp(g_h)·sin(hθ)
        acc_s = s_cur                                    # Σ_h sin(hθ)       (EPS term)
        for h in range(1, n_harmonics):
            s_prev, s_cur = s_cur, c2 * s_cur - s_prev
            acc_g = acc_g + ehgc_ref[h] * s_cur          # scalar read from SMEM per use
            acc_s = acc_s + s_cur

        if use_basis_gain:
            res = eb * acc_g + eps * acc_s
        else:
            res = acc_g + eps * acc_s
        out_ref[:, pl.ds(t0, strip_t)] = res.astype(out_ref.dtype)

    if n_strips == 1:
        strip_body(0)
    else:
        def body(i, carry):
            strip_body(i)
            return carry
        lax.fori_loop(0, n_strips, body, 0)


def drone_noise_gen(speed_rps, poly_coeffs, harmonic_gain_corrections, log_motor_coeffs,
                    phase_shifts, *, n_blades=2, sample_rate=16000, use_basis_gain=True,
                    tile_rows=8, tile_t=2048, strip_t=512):
    """DroneNoiseGen.forward. speed_rps: [..., n_motors, T] -> [..., T]."""
    orig_dtype = speed_rps.dtype
    *batch, n_motors, T = speed_rps.shape
    assert n_motors == log_motor_coeffs.shape[0]
    n_harmonics = int(harmonic_gain_corrections.shape[0])
    n_poly = int(poly_coeffs.shape[0])
    B = int(np.prod(batch)) if batch else 1
    rows = B * n_motors

    sp = speed_rps.reshape(rows, T)

    # Base (h=1) phase per (batch, motor) row, range-reduced mod 2π (exact for the integer
    # harmonics; keeps f32 sin/cos and the recurrence accurate for long clips).
    # TODO(synk): freq_series_to_wav is not in the spec; implemented as the standard
    # phase-accumulating oscillator sin(2*pi*cumsum(freq)/sr + phase_shift).
    ps_row = jnp.tile(phase_shifts.astype(jnp.float32), (B,))              # [rows]
    theta = (2.0 * math.pi * n_blades / sample_rate) * jnp.cumsum(
        sp.astype(jnp.float32), axis=-1) + (n_blades * ps_row)[:, None]
    theta = jnp.mod(theta, 2.0 * math.pi)

    # Tile geometry: DMA block (tile_rows, tile_t); in-register strip (tile_rows, strip_t).
    strip_t = min(strip_t, pl.cdiv(T, 128) * 128)
    tile_t = min(tile_t, pl.cdiv(T, strip_t) * strip_t)
    assert tile_t % strip_t == 0
    rows_p = pl.cdiv(rows, tile_rows) * tile_rows
    t_p = pl.cdiv(T, tile_t) * tile_t

    streamed = [theta]
    if use_basis_gain:
        streamed.append(sp)                                                # native dtype
    if rows_p != rows or t_p != T:
        pad = ((0, rows_p - rows), (0, t_p - T))
        streamed = [jnp.pad(a, pad) for a in streamed]

    ehgc = jnp.exp(harmonic_gain_corrections).astype(jnp.float32)          # SMEM, (H,)
    smem_spec = pl.BlockSpec(memory_space=pltpu.MemorySpace.SMEM)
    block = pl.BlockSpec((tile_rows, tile_t), lambda r, t: (r, t))

    if use_basis_gain:
        scalars = [poly_coeffs.astype(jnp.float32), ehgc]
        in_specs = [smem_spec, smem_spec, block, block]
    else:
        scalars = [ehgc]
        in_specs = [smem_spec, block]

    kernel = functools.partial(_drone_kernel, n_harmonics=n_harmonics, n_poly=n_poly,
                               use_basis_gain=use_basis_gain, eps=EPS, strip_t=strip_t)

    prop = pl.pallas_call(
        kernel,
        out_shape=jax.ShapeDtypeStruct((rows_p, t_p), orig_dtype),
        grid_spec=pltpu.PrefetchScalarGridSpec(
            num_scalar_prefetch=0,
            grid=(rows_p // tile_rows, t_p // tile_t),
            in_specs=in_specs,
            out_specs=block,
        ),
        compiler_params=pltpu.CompilerParams(
            dimension_semantics=("parallel", "parallel"),
        ),
    )(*scalars, *streamed)

    # DroneNoiseGen epilogue: weighted sum over motors (tiny 1xM matmul, left in XLA).
    prop = prop[:rows, :T].reshape(B, n_motors, T)
    out = jnp.einsum("m,bmt->bt", jnp.exp(log_motor_coeffs).astype(prop.dtype), prop)
    return out.reshape(tuple(batch) + (T,)).astype(orig_dtype)


def _reference(speed_rps, poly_coeffs, harmonic_gain_corrections, log_motor_coeffs,
               phase_shifts, n_blades, sample_rate):
    """Pure-JAX mirror of the PyTorch module (materializes the [.., M, H, T] tensor)."""
    *batch, n_motors, T = speed_rps.shape
    H = harmonic_gain_corrections.shape[0]
    coeffs = jnp.arange(1, H + 1, dtype=speed_rps.dtype)
    ps = jnp.broadcast_to(phase_shifts, tuple(batch) + (n_motors,))
    harm_ps = (ps * n_blades)[..., None] * coeffs                          # [..., M, H]
    harm_fr = coeffs[:, None] * (speed_rps * n_blades)[..., None, :]       # [..., M, H, T]
    phases = (2.0 * jnp.pi * jnp.cumsum(harm_fr, axis=-1) / sample_rate
              + harm_ps[..., None])
    harmonics = jnp.sin(phases)
    x = speed_rps / SPEED_OF_SOUND
    powers = jnp.stack([x ** i for i in range(1, poly_coeffs.shape[0] + 1)], axis=-1)
    basis = jnp.matmul(powers, poly_coeffs[:, None])[..., 0]               # [..., M, T]
    gains = basis[..., None, :] + harmonic_gain_corrections[:, None]       # [..., M, H, T]
    prop = ((jnp.exp(gains) + EPS) * harmonics).sum(axis=-2)               # [..., M, T]
    return jnp.einsum("m,...mt->...t", jnp.exp(log_motor_coeffs), prop)


if __name__ == "__main__":
    key = jax.random.PRNGKey(0)
    k_pc, k_hgc, k_lmc, k_spd = jax.random.split(key, 4)

    n_motors, n_blades, n_harmonics = 4, 2, 50
    # TODO(synk): settings.SAMPLE_RATE is external to the spec; using 16 kHz.
    sample_rate = 16000
    B, T = 2, 4096

    # Parameter init matching the module's __init__ shapes:
    poly_coeffs = jnp.abs(jax.random.normal(k_pc, (2,)) * 1e-4)        # basis gain, no bias
    harmonic_gain_corrections = jax.random.normal(k_hgc, (n_harmonics,))
    log_motor_coeffs = jax.random.uniform(k_lmc, (n_motors,))
    phase_shifts = jnp.zeros((n_motors,), jnp.float32)                 # zeros, as in __init__

    speed_rps = 1.0 + 2.0 * jax.random.uniform(k_spd, (B, n_motors, T), dtype=jnp.float32)

    fwd = jax.jit(functools.partial(drone_noise_gen, n_blades=n_blades,
                                    sample_rate=sample_rate))
    out = jax.block_until_ready(fwd(speed_rps, poly_coeffs, harmonic_gain_corrections,
                                    log_motor_coeffs, phase_shifts))

    ref = _reference(speed_rps, poly_coeffs, harmonic_gain_corrections,
                     log_motor_coeffs, phase_shifts, n_blades, sample_rate)

    assert out.shape == (B, T)
    # Error model: the kernel scales one range-reduced base-phase cumsum by h (then builds
    # sin(hθ) with an exact-in-exact-arithmetic recurrence), while the reference cumsums
    # each harmonic independently in f32; both are valid f32 orderings whose difference
    # grows ~h·eps_f32·|θ|, so compare against the signal scale.
    scale = float(jnp.max(jnp.abs(ref)))
    max_err = float(jnp.max(jnp.abs(out - ref)))
    assert max_err <= 2e-2 * scale, f"mismatch: max_err={max_err}, scale={scale}"
    print("KERNEL_OK")
</pallas_src>

<mosaic_0001>
module attributes {stable_mosaic.version = 11 : i64} {
  func.func @_drone_kernel(%arg0: i32, %arg1: i32, %arg2: memref<2xf32, #tpu.memory_space<smem>>, %arg3: memref<50xf32, #tpu.memory_space<smem>>, %arg4: memref<8x2048xf32, #tpu.memory_space<vmem>>, %arg5: memref<8x2048xf32, #tpu.memory_space<vmem>>, %arg6: memref<8x2048xf32, #tpu.memory_space<vmem>>) attributes {dimension_semantics = [#tpu.dimension_semantics<parallel>, #tpu.dimension_semantics<parallel>], iteration_bounds = array<i64: 1, 2>, scalar_prefetch = 0 : i64, scratch_operands = 0 : i64, tpu.core_type = #tpu.core_type<tc>, window_params = [{transform_indices = @transform_0, window_bounds = array<i64: 2>}, {transform_indices = @transform_1, window_bounds = array<i64: 50>}, {transform_indices = @transform_2, window_bounds = array<i64: 8, 2048>}, {transform_indices = @transform_3, window_bounds = array<i64: 8, 2048>}, {transform_indices = @transform_4, window_bounds = array<i64: 8, 2048>}]} {
    %c0_i32 = arith.constant 0 : i32
    %c4_i32 = arith.constant 4 : i32
    %0 = arith.addi %c0_i32, %c4_i32 : i32
    %c1_i32 = arith.constant 1 : i32
    scf.for %arg7 = %c0_i32 to %0 step %c1_i32  : i32 {
      %c512_i32 = arith.constant 512 : i32
      %1 = arith.muli %arg7, %c512_i32 : i32
      %2 = tpu.assume_multiple %1, 512 : i32
      %c0 = arith.constant 0 : index
      %3 = arith.index_cast %2 : i32 to index
      %4 = vector.load %arg4[%c0, %3] : memref<8x2048xf32, #tpu.memory_space<vmem>>, vector<8x512xf32>
      %5 = math.sin %4 : vector<8x512xf32>
      %6 = math.cos %4 : vector<8x512xf32>
      %cst = arith.constant 2.000000e+00 : f32
      %7 = vector.broadcast %cst : f32 to vector<8x512xf32>
      %8 = arith.mulf %7, %6 : vector<8x512xf32>
      %c0_1 = arith.constant 0 : index
      %9 = arith.index_cast %2 : i32 to index
      %10 = vector.load %arg5[%c0_1, %9] : memref<8x2048xf32, #tpu.memory_space<vmem>>, vector<8x512xf32>
      %cst_2 = arith.constant 0.002915452 : f32
      %11 = vector.broadcast %cst_2 : f32 to vector<8x512xf32>
      %12 = arith.mulf %10, %11 : vector<8x512xf32>
      %c1 = arith.constant 1 : index
      %13 = memref.load %arg2[%c1] : memref<2xf32, #tpu.memory_space<smem>>
      %c0_3 = arith.constant 0 : index
      %14 = memref.load %arg2[%c0_3] : memref<2xf32, #tpu.memory_space<smem>>
      %15 = vector.broadcast %13 : f32 to vector<8x512xf32>
      %16 = arith.mulf %12, %15 : vector<8x512xf32>
      %17 = vector.broadcast %14 : f32 to vector<8x512xf32>
      %18 = arith.addf %17, %16 : vector<8x512xf32>
      %19 = arith.mulf %12, %18 : vector<8x512xf32>
      %20 = math.exp %19 : vector<8x512xf32>
      %cst_4 = arith.constant 0.000000e+00 : f32
      %21 = vector.broadcast %cst_4 : f32 to vector<8x512xf32>
      %c0_5 = arith.constant 0 : index
      %22 = memref.load %arg3[%c0_5] : memref<50xf32, #tpu.memory_space<smem>>
      %23 = vector.broadcast %22 : f32 to vector<8x512xf32>
      %24 = arith.mulf %23, %5 : vector<8x512xf32>
      %25 = arith.mulf %8, %5 : vector<8x512xf32>
      %26 = arith.subf %25, %21 : vector<8x512xf32>
      %c1_6 = arith.constant 1 : index
      %27 = memref.load %arg3[%c1_6] : memref<50xf32, #tpu.memory_space<smem>>
      %28 = vector.broadcast %27 : f32 to vector<8x512xf32>
      %29 = arith.mulf %28, %26 : vector<8x512xf32>
      %30 = arith.addf %24, %29 : vector<8x512xf32>
      %31 = arith.addf %5, %26 : vector<8x512xf32>
      %32 = arith.mulf %8, %26 : vector<8x512xf32>
      %33 = arith.subf %32, %5 : vector<8x512xf32>
      %c2 = arith.constant 2 : index
      %34 = memref.load %arg3[%c2] : memref<50xf32, #tpu.memory_space<smem>>
      %35 = vector.broadcast %34 : f32 to vector<8x512xf32>
      %36 = arith.mulf %35, %33 : vector<8x512xf32>
      %37 = arith.addf %30, %36 : vector<8x512xf32>
      %38 = arith.addf %31, %33 : vector<8x512xf32>
      %39 = arith.mulf %8, %33 : vector<8x512xf32>
      %40 = arith.subf %39, %26 : vector<8x512xf32>
      %c3 = arith.constant 3 : index
      %41 = memref.load %arg3[%c3] : memref<50xf32, #tpu.memory_space<smem>>
      %42 = vector.broadcast %41 : f32 to vector<8x512xf32>
      %43 = arith.mulf %42, %40 : vector<8x512xf32>
      %44 = arith.addf %37, %43 : vector<8x512xf32>
      %45 = arith.addf %38, %40 : vector<8x512xf32>
      %46 = arith.mulf %8, %40 : vector<8x512xf32>
      %47 = arith.subf %46, %33 : vector<8x512xf32>
      %c4 = arith.constant 4 : index
      %48 = memref.load %arg3[%c4] : memref<50xf32, #tpu.memory_space<smem>>
      %49 = vector.broadcast %48 : f32 to vector<8x512xf32>
      %50 = arith.mulf %49, %47 : vector<8x512xf32>
      %51 = arith.addf %44, %50 : vector<8x512xf32>
      %52 = arith.addf %45, %47 : vector<8x512xf32>
      %53 = arith.mulf %8, %47 : vector<8x512xf32>
      %54 = arith.subf %53, %40 : vector<8x512xf32>
      %c5 = arith.constant 5 : index
      %55 = memref.load %arg3[%c5] : memref<50xf32, #tpu.memory_space<smem>>
      %56 = vector.broadcast %55 : f32 to vector<8x512xf32>
      %57 = arith.mulf %56, %54 : vector<8x512xf32>
      %58 = arith.addf %51, %57 : vector<8x512xf32>
      %59 = arith.addf %52, %54 : vector<8x512xf32>
      %60 = arith.mulf %8, %54 : vector<8x512xf32>
      %61 = arith.subf %60, %47 : vector<8x512xf32>
      %c6 = arith.constant 6 : index
      %62 = memref.load %arg3[%c6] : memref<50xf32, #tpu.memory_space<smem>>
      %63 = vector.broadcast %62 : f32 to vector<8x512xf32>
      %64 = arith.mulf %63, %61 : vector<8x512xf32>
      %65 = arith.addf %58, %64 : vector<8x512xf32>
      %66 = arith.addf %59, %61 : vector<8x512xf32>
      %67 = arith.mulf %8, %61 : vector<8x512xf32>
      %68 = arith.subf %67, %54 : vector<8x512xf32>
      %c7 = arith.constant 7 : index
      %69 = memref.load %arg3[%c7] : memref<50xf32, #tpu.memory_space<smem>>
      %70 = vector.broadcast %69 : f32 to vector<8x512xf32>
      %71 = arith.mulf %70, %68 : vector<8x512xf32>
      %72 = arith.addf %65, %71 : vector<8x512xf32>
      %73 = arith.addf %66, %68 : vector<8x512xf32>
      %74 = arith.mulf %8, %68 : vector<8x512xf32>
      %75 = arith.subf %74, %61 : vector<8x512xf32>
      %c8 = arith.constant 8 : index
      %76 = memref.load %arg3[%c8] : memref<50xf32, #tpu.memory_space<smem>>
      %77 = vector.broadcast %76 : f32 to vector<8x512xf32>
      %78 = arith.mulf %77, %75 : vector<8x512xf32>
      %79 = arith.addf %72, %78 : vector<8x512xf32>
      %80 = arith.addf %73, %75 : vector<8x512xf32>
      %81 = arith.mulf %8, %75 : vector<8x512xf32>
      %82 = arith.subf %81, %68 : vector<8x512xf32>
      %c9 = arith.constant 9 : index
      %83 = memref.load %arg3[%c9] : memref<50xf32, #tpu.memory_space<smem>>
      %84 = vector.broadcast %83 : f32 to vector<8x512xf32>
      %85 = arith.mulf %84, %82 : vector<8x512xf32>
      %86 = arith.addf %79, %85 : vector<8x512xf32>
      %87 = arith.addf %80, %82 : vector<8x512xf32>
      %88 = arith.mulf %8, %82 : vector<8x512xf32>
      %89 = arith.subf %88, %75 : vector<8x512xf32>
      %c10 = arith.constant 10 : index
      %90 = memref.load %arg3[%c10] : memref<50xf32, #tpu.memory_space<smem>>
      %91 = vector.broadcast %90 : f32 to vector<8x512xf32>
      %92 = arith.mulf %91, %89 : vector<8x512xf32>
      %93 = arith.addf %86, %92 : vector<8x512xf32>
      %94 = arith.addf %87, %89 : vector<8x512xf32>
      %95 = arith.mulf %8, %89 : vector<8x512xf32>
      %96 = arith.subf %95, %82 : vector<8x512xf32>
      %c11 = arith.constant 11 : index
      %97 = memref.load %arg3[%c11] : memref<50xf32, #tpu.memory_space<smem>>
      %98 = vector.broadcast %97 : f32 to vector<8x512xf32>
      %99 = arith.mulf %98, %96 : vector<8x512xf32>
      %100 = arith.addf %93, %99 : vector<8x512xf32>
      %101 = arith.addf %94, %96 : vector<8x512xf32>
      %102 = arith.mulf %8, %96 : vector<8x512xf32>
      %103 = arith.subf %102, %89 : vector<8x512xf32>
      %c12 = arith.constant 12 : index
      %104 = memref.load %arg3[%c12] : memref<50xf32, #tpu.memory_space<smem>>
      %105 = vector.broadcast %104 : f32 to vector<8x512xf32>
      %106 = arith.mulf %105, %103 : vector<8x512xf32>
      %107 = arith.addf %100, %106 : vector<8x512xf32>
      %108 = arith.addf %101, %103 : vector<8x512xf32>
      %109 = arith.mulf %8, %103 : vector<8x512xf32>
      %110 = arith.subf %109, %96 : vector<8x512xf32>
      %c13 = arith.constant 13 : index
      %111 = memref.load %arg3[%c13] : memref<50xf32, #tpu.memory_space<smem>>
      %112 = vector.broadcast %111 : f32 to vector<8x512xf32>
      %113 = arith.mulf %112, %110 : vector<8x512xf32>
      %114 = arith.addf %107, %113 : vector<8x512xf32>
      %115 = arith.addf %108, %110 : vector<8x512xf32>
      %116 = arith.mulf %8, %110 : vector<8x512xf32>
      %117 = arith.subf %116, %103 : vector<8x512xf32>
      %c14 = arith.constant 14 : index
      %118 = memref.load %arg3[%c14] : memref<50xf32, #tpu.memory_space<smem>>
      %119 = vector.broadcast %118 : f32 to vector<8x512xf32>
      %120 = arith.mulf %119, %117 : vector<8x512xf32>
      %121 = arith.addf %114, %120 : vector<8x512xf32>
      %122 = arith.addf %115, %117 : vector<8x512xf32>
      %123 = arith.mulf %8, %117 : vector<8x512xf32>
      %124 = arith.subf %123, %110 : vector<8x512xf32>
      %c15 = arith.constant 15 : index
      %125 = memref.load %arg3[%c15] : memref<50xf32, #tpu.memory_space<smem>>
      %126 = vector.broadcast %125 : f32 to vector<8x512xf32>
      %127 = arith.mulf %126, %124 : vector<8x512xf32>
      %128 = arith.addf %121, %127 : vector<8x512xf32>
      %129 = arith.addf %122, %124 : vector<8x512xf32>
      %130 = arith.mulf %8, %124 : vector<8x512xf32>
      %131 = arith.subf %130, %117 : vector<8x512xf32>
      %c16 = arith.constant 16 : index
      %132 = memref.load %arg3[%c16] : memref<50xf32, #tpu.memory_space<smem>>
      %133 = vector.broadcast %132 : f32 to vector<8x512xf32>
      %134 = arith.mulf %133, %131 : vector<8x512xf32>
      %135 = arith.addf %128, %134 : vector<8x512xf32>
      %136 = arith.addf %129, %131 : vector<8x512xf32>
      %137 = arith.mulf %8, %131 : vector<8x512xf32>
      %138 = arith.subf %137, %124 : vector<8x512xf32>
      %c17 = arith.constant 17 : index
      %139 = memref.load %arg3[%c17] : memref<50xf32, #tpu.memory_space<smem>>
      %140 = vector.broadcast %139 : f32 to vector<8x512xf32>
      %141 = arith.mulf %140, %138 : vector<8x512xf32>
      %142 = arith.addf %135, %141 : vector<8x512xf32>
      %143 = arith.addf %136, %138 : vector<8x512xf32>
      %144 = arith.mulf %8, %138 : vector<8x512xf32>
      %145 = arith.subf %144, %131 : vector<8x512xf32>
      %c18 = arith.constant 18 : index
      %146 = memref.load %arg3[%c18] : memref<50xf32, #tpu.memory_space<smem>>
      %147 = vector.broadcast %146 : f32 to vector<8x512xf32>
      %148 = arith.mulf %147, %145 : vector<8x512xf32>
      %149 = arith.addf %142, %148 : vector<8x512xf32>
      %150 = arith.addf %143, %145 : vector<8x512xf32>
      %151 = arith.mulf %8, %145 : vector<8x512xf32>
      %152 = arith.subf %151, %138 : vector<8x512xf32>
      %c19 = arith.constant 19 : index
      %153 = memref.load %arg3[%c19] : memref<50xf32, #tpu.memory_space<smem>>
      %154 = vector.broadcast %153 : f32 to vector<8x512xf32>
      %155 = arith.mulf %154, %152 : vector<8x512xf32>
      %156 = arith.addf %149, %155 : vector<8x512xf32>
      %157 = arith.addf %150, %152 : vector<8x512xf32>
      %158 = arith.mulf %8, %152 : vector<8x512xf32>
      %159 = arith.subf %158, %145 : vector<8x512xf32>
      %c20 = arith.constant 20 : index
      %160 = memref.load %arg3[%c20] : memref<50xf32, #tpu.memory_space<smem>>
      %161 = vector.broadcast %160 : f32 to vector<8x512xf32>
      %162 = arith.mulf %161, %159 : vector<8x512xf32>
      %163 = arith.addf %156, %162 : vector<8x512xf32>
      %164 = arith.addf %157, %159 : vector<8x512xf32>
      %165 = arith.mulf %8, %159 : vector<8x512xf32>
      %166 = arith.subf %165, %152 : vector<8x512xf32>
      %c21 = arith.constant 21 : index
      %167 = memref.load %arg3[%c21] : memref<50xf32, #tpu.memory_space<smem>>
      %168 = vector.broadcast %167 : f32 to vector<8x512xf32>
      %169 = arith.mulf %168, %166 : vector<8x512xf32>
      %170 = arith.addf %163, %169 : vector<8x512xf32>
      %171 = arith.addf %164, %166 : vector<8x512xf32>
      %172 = arith.mulf %8, %166 : vector<8x512xf32>
      %173 = arith.subf %172, %159 : vector<8x512xf32>
      %c22 = arith.constant 22 : index
      %174 = memref.load %arg3[%c22] : memref<50xf32, #tpu.memory_space<smem>>
      %175 = vector.broadcast %174 : f32 to vector<8x512xf32>
      %176 = arith.mulf %175, %173 : vector<8x512xf32>
      %177 = arith.addf %170, %176 : vector<8x512xf32>
      %178 = arith.addf %171, %173 : vector<8x512xf32>
      %179 = arith.mulf %8, %173 : vector<8x512xf32>
      %180 = arith.subf %179, %166 : vector<8x512xf32>
      %c23 = arith.constant 23 : index
      %181 = memref.load %arg3[%c23] : memref<50xf32, #tpu.memory_space<smem>>
      %182 = vector.broadcast %181 : f32 to vector<8x512xf32>
      %183 = arith.mulf %182, %180 : vector<8x512xf32>
      %184 = arith.addf %177, %183 : vector<8x512xf32>
      %185 = arith.addf %178, %180 : vector<8x512xf32>
      %186 = arith.mulf %8, %180 : vector<8x512xf32>
      %187 = arith.subf %186, %173 : vector<8x512xf32>
      %c24 = arith.constant 24 : index
      %188 = memref.load %arg3[%c24] : memref<50xf32, #tpu.memory_space<smem>>
      %189 = vector.broadcast %188 : f32 to vector<8x512xf32>
      %190 = arith.mulf %189, %187 : vector<8x512xf32>
      %191 = arith.addf %184, %190 : vector<8x512xf32>
      %192 = arith.addf %185, %187 : vector<8x512xf32>
      %193 = arith.mulf %8, %187 : vector<8x512xf32>
      %194 = arith.subf %193, %180 : vector<8x512xf32>
      %c25 = arith.constant 25 : index
      %195 = memref.load %arg3[%c25] : memref<50xf32, #tpu.memory_space<smem>>
      %196 = vector.broadcast %195 : f32 to vector<8x512xf32>
      %197 = arith.mulf %196, %194 : vector<8x512xf32>
      %198 = arith.addf %191, %197 : vector<8x512xf32>
      %199 = arith.addf %192, %194 : vector<8x512xf32>
      %200 = arith.mulf %8, %194 : vector<8x512xf32>
      %201 = arith.subf %200, %187 : vector<8x512xf32>
      %c26 = arith.constant 26 : index
      %202 = memref.load %arg3[%c26] : memref<50xf32, #tpu.memory_space<smem>>
      %203 = vector.broadcast %202 : f32 to vector<8x512xf32>
      %204 = arith.mulf %203, %201 : vector<8x512xf32>
      %205 = arith.addf %198, %204 : vector<8x512xf32>
      %206 = arith.addf %199, %201 : vector<8x512xf32>
      %207 = arith.mulf %8, %201 : vector<8x512xf32>
      %208 = arith.subf %207, %194 : vector<8x512xf32>
      %c27 = arith.constant 27 : index
      %209 = memref.load %arg3[%c27] : memref<50xf32, #tpu.memory_space<smem>>
      %210 = vector.broadcast %209 : f32 to vector<8x512xf32>
      %211 = arith.mulf %210, %208 : vector<8x512xf32>
      %212 = arith.addf %205, %211 : vector<8x512xf32>
      %213 = arith.addf %206, %208 : vector<8x512xf32>
      %214 = arith.mulf %8, %208 : vector<8x512xf32>
      %215 = arith.subf %214, %201 : vector<8x512xf32>
      %c28 = arith.constant 28 : index
      %216 = memref.load %arg3[%c28] : memref<50xf32, #tpu.memory_space<smem>>
      %217 = vector.broadcast %216 : f32 to vector<8x512xf32>
      %218 = arith.mulf %217, %215 : vector<8x512xf32>
      %219 = arith.addf %212, %218 : vector<8x512xf32>
      %220 = arith.addf %213, %215 : vector<8x512xf32>
      %221 = arith.mulf %8, %215 : vector<8x512xf32>
      %222 = arith.subf %221, %208 : vector<8x512xf32>
      %c29 = arith.constant 29 : index
      %223 = memref.load %arg3[%c29] : memref<50xf32, #tpu.memory_space<smem>>
      %224 = vector.broadcast %223 : f32 to vector<8x512xf32>
      %225 = arith.mulf %224, %222 : vector<8x512xf32>
      %226 = arith.addf %219, %225 : vector<8x512xf32>
      %227 = arith.addf %220, %222 : vector<8x512xf32>
      %228 = arith.mulf %8, %222 : vector<8x512xf32>
      %229 = arith.subf %228, %215 : vector<8x512xf32>
      %c30 = arith.constant 30 : index
      %230 = memref.load %arg3[%c30] : memref<50xf32, #tpu.memory_space<smem>>
      %231 = vector.broadcast %230 : f32 to vector<8x512xf32>
      %232 = arith.mulf %231, %229 : vector<8x512xf32>
      %233 = arith.addf %226, %232 : vector<8x512xf32>
      %234 = arith.addf %227, %229 : vector<8x512xf32>
      %235 = arith.mulf %8, %229 : vector<8x512xf32>
      %236 = arith.subf %235, %222 : vector<8x512xf32>
      %c31 = arith.constant 31 : index
      %237 = memref.load %arg3[%c31] : memref<50xf32, #tpu.memory_space<smem>>
      %238 = vector.broadcast %237 : f32 to vector<8x512xf32>
      %239 = arith.mulf %238, %236 : vector<8x512xf32>
      %240 = arith.addf %233, %239 : vector<8x512xf32>
      %241 = arith.addf %234, %236 : vector<8x512xf32>
      %242 = arith.mulf %8, %236 : vector<8x512xf32>
      %243 = arith.subf %242, %229 : vector<8x512xf32>
      %c32 = arith.constant 32 : index
      %244 = memref.load %arg3[%c32] : memref<50xf32, #tpu.memory_space<smem>>
      %245 = vector.broadcast %244 : f32 to vector<8x512xf32>
      %246 = arith.mulf %245, %243 : vector<8x512xf32>
      %247 = arith.addf %240, %246 : vector<8x512xf32>
      %248 = arith.addf %241, %243 : vector<8x512xf32>
      %249 = arith.mulf %8, %243 : vector<8x512xf32>
      %250 = arith.subf %249, %236 : vector<8x512xf32>
      %c33 = arith.constant 33 : index
      %251 = memref.load %arg3[%c33] : memref<50xf32, #tpu.memory_space<smem>>
      %252 = vector.broadcast %251 : f32 to vector<8x512xf32>
      %253 = arith.mulf %252, %250 : vector<8x512xf32>
      %254 = arith.addf %247, %253 : vector<8x512xf32>
      %255 = arith.addf %248, %250 : vector<8x512xf32>
      %256 = arith.mulf %8, %250 : vector<8x512xf32>
      %257 = arith.subf %256, %243 : vector<8x512xf32>
      %c34 = arith.constant 34 : index
      %258 = memref.load %arg3[%c34] : memref<50xf32, #tpu.memory_space<smem>>
      %259 = vector.broadcast %258 : f32 to vector<8x512xf32>
      %260 = arith.mulf %259, %257 : vector<8x512xf32>
      %261 = arith.addf %254, %260 : vector<8x512xf32>
      %262 = arith.addf %255, %257 : vector<8x512xf32>
      %263 = arith.mulf %8, %257 : vector<8x512xf32>
      %264 = arith.subf %263, %250 : vector<8x512xf32>
      %c35 = arith.constant 35 : index
      %265 = memref.load %arg3[%c35] : memref<50xf32, #tpu.memory_space<smem>>
      %266 = vector.broadcast %265 : f32 to vector<8x512xf32>
      %267 = arith.mulf %266, %264 : vector<8x512xf32>
      %268 = arith.addf %261, %267 : vector<8x512xf32>
      %269 = arith.addf %262, %264 : vector<8x512xf32>
      %270 = arith.mulf %8, %264 : vector<8x512xf32>
      %271 = arith.subf %270, %257 : vector<8x512xf32>
      %c36 = arith.constant 36 : index
      %272 = memref.load %arg3[%c36] : memref<50xf32, #tpu.memory_space<smem>>
      %273 = vector.broadcast %272 : f32 to vector<8x512xf32>
      %274 = arith.mulf %273, %271 : vector<8x512xf32>
      %275 = arith.addf %268, %274 : vector<8x512xf32>
      %276 = arith.addf %269, %271 : vector<8x512xf32>
      %277 = arith.mulf %8, %271 : vector<8x512xf32>
      %278 = arith.subf %277, %264 : vector<8x512xf32>
      %c37 = arith.constant 37 : index
      %279 = memref.load %arg3[%c37] : memref<50xf32, #tpu.memory_space<smem>>
      %280 = vector.broadcast %279 : f32 to vector<8x512xf32>
      %281 = arith.mulf %280, %278 : vector<8x512xf32>
      %282 = arith.addf %275, %281 : vector<8x512xf32>
      %283 = arith.addf %276, %278 : vector<8x512xf32>
      %284 = arith.mulf %8, %278 : vector<8x512xf32>
      %285 = arith.subf %284, %271 : vector<8x512xf32>
      %c38 = arith.constant 38 : index
      %286 = memref.load %arg3[%c38] : memref<50xf32, #tpu.memory_space<smem>>
      %287 = vector.broadcast %286 : f32 to vector<8x512xf32>
      %288 = arith.mulf %287, %285 : vector<8x512xf32>
      %289 = arith.addf %282, %288 : vector<8x512xf32>
      %290 = arith.addf %283, %285 : vector<8x512xf32>
      %291 = arith.mulf %8, %285 : vector<8x512xf32>
      %292 = arith.subf %291, %278 : vector<8x512xf32>
      %c39 = arith.constant 39 : index
      %293 = memref.load %arg3[%c39] : memref<50xf32, #tpu.memory_space<smem>>
      %294 = vector.broadcast %293 : f32 to vector<8x512xf32>
      %295 = arith.mulf %294, %292 : vector<8x512xf32>
      %296 = arith.addf %289, %295 : vector<8x512xf32>
      %297 = arith.addf %290, %292 : vector<8x512xf32>
      %298 = arith.mulf %8, %292 : vector<8x512xf32>
      %299 = arith.subf %298, %285 : vector<8x512xf32>
      %c40 = arith.constant 40 : index
      %300 = memref.load %arg3[%c40] : memref<50xf32, #tpu.memory_space<smem>>
      %301 = vector.broadcast %300 : f32 to vector<8x512xf32>
      %302 = arith.mulf %301, %299 : vector<8x512xf32>
      %303 = arith.addf %296, %302 : vector<8x512xf32>
      %304 = arith.addf %297, %299 : vector<8x512xf32>
      %305 = arith.mulf %8, %299 : vector<8x512xf32>
      %306 = arith.subf %305, %292 : vector<8x512xf32>
      %c41 = arith.constant 41 : index
      %307 = memref.load %arg3[%c41] : memref<50xf32, #tpu.memory_space<smem>>
      %308 = vector.broadcast %307 : f32 to vector<8x512xf32>
      %309 = arith.mulf %308, %306 : vector<8x512xf32>
      %310 = arith.addf %303, %309 : vector<8x512xf32>
      %311 = arith.addf %304, %306 : vector<8x512xf32>
      %312 = arith.mulf %8, %306 : vector<8x512xf32>
      %313 = arith.subf %312, %299 : vector<8x512xf32>
      %c42 = arith.constant 42 : index
      %314 = memref.load %arg3[%c42] : memref<50xf32, #tpu.memory_space<smem>>
      %315 = vector.broadcast %314 : f32 to vector<8x512xf32>
      %316 = arith.mulf %315, %313 : vector<8x512xf32>
      %317 = arith.addf %310, %316 : vector<8x512xf32>
      %318 = arith.addf %311, %313 : vector<8x512xf32>
      %319 = arith.mulf %8, %313 : vector<8x512xf32>
      %320 = arith.subf %319, %306 : vector<8x512xf32>
      %c43 = arith.constant 43 : index
      %321 = memref.load %arg3[%c43] : memref<50xf32, #tpu.memory_space<smem>>
      %322 = vector.broadcast %321 : f32 to vector<8x512xf32>
      %323 = arith.mulf %322, %320 : vector<8x512xf32>
      %324 = arith.addf %317, %323 : vector<8x512xf32>
      %325 = arith.addf %318, %320 : vector<8x512xf32>
      %326 = arith.mulf %8, %320 : vector<8x512xf32>
      %327 = arith.subf %326, %313 : vector<8x512xf32>
      %c44 = arith.constant 44 : index
      %328 = memref.load %arg3[%c44] : memref<50xf32, #tpu.memory_space<smem>>
      %329 = vector.broadcast %328 : f32 to vector<8x512xf32>
      %330 = arith.mulf %329, %327 : vector<8x512xf32>
      %331 = arith.addf %324, %330 : vector<8x512xf32>
      %332 = arith.addf %325, %327 : vector<8x512xf32>
      %333 = arith.mulf %8, %327 : vector<8x512xf32>
      %334 = arith.subf %333, %320 : vector<8x512xf32>
      %c45 = arith.constant 45 : index
      %335 = memref.load %arg3[%c45] : memref<50xf32, #tpu.memory_space<smem>>
      %336 = vector.broadcast %335 : f32 to vector<8x512xf32>
      %337 = arith.mulf %336, %334 : vector<8x512xf32>
      %338 = arith.addf %331, %337 : vector<8x512xf32>
      %339 = arith.addf %332, %334 : vector<8x512xf32>
      %340 = arith.mulf %8, %334 : vector<8x512xf32>
      %341 = arith.subf %340, %327 : vector<8x512xf32>
      %c46 = arith.constant 46 : index
      %342 = memref.load %arg3[%c46] : memref<50xf32, #tpu.memory_space<smem>>
      %343 = vector.broadcast %342 : f32 to vector<8x512xf32>
      %344 = arith.mulf %343, %341 : vector<8x512xf32>
      %345 = arith.addf %338, %344 : vector<8x512xf32>
      %346 = arith.addf %339, %341 : vector<8x512xf32>
      %347 = arith.mulf %8, %341 : vector<8x512xf32>
      %348 = arith.subf %347, %334 : vector<8x512xf32>
      %c47 = arith.constant 47 : index
      %349 = memref.load %arg3[%c47] : memref<50xf32, #tpu.memory_space<smem>>
      %350 = vector.broadcast %349 : f32 to vector<8x512xf32>
      %351 = arith.mulf %350, %348 : vector<8x512xf32>
      %352 = arith.addf %345, %351 : vector<8x512xf32>
      %353 = arith.addf %346, %348 : vector<8x512xf32>
      %354 = arith.mulf %8, %348 : vector<8x512xf32>
      %355 = arith.subf %354, %341 : vector<8x512xf32>
      %c48 = arith.constant 48 : index
      %356 = memref.load %arg3[%c48] : memref<50xf32, #tpu.memory_space<smem>>
      %357 = vector.broadcast %356 : f32 to vector<8x512xf32>
      %358 = arith.mulf %357, %355 : vector<8x512xf32>
      %359 = arith.addf %352, %358 : vector<8x512xf32>
      %360 = arith.addf %353, %355 : vector<8x512xf32>
      %361 = arith.mulf %8, %355 : vector<8x512xf32>
      %362 = arith.subf %361, %348 : vector<8x512xf32>
      %c49 = arith.constant 49 : index
      %363 = memref.load %arg3[%c49] : memref<50xf32, #tpu.memory_space<smem>>
      %364 = vector.broadcast %363 : f32 to vector<8x512xf32>
      %365 = arith.mulf %364, %362 : vector<8x512xf32>
      %366 = arith.addf %359, %365 : vector<8x512xf32>
      %367 = arith.addf %360, %362 : vector<8x512xf32>
      %368 = arith.mulf %20, %366 : vector<8x512xf32>
      %cst_7 = arith.constant 9.99999993E-9 : f32
      %369 = vector.broadcast %cst_7 : f32 to vector<8x512xf32>
      %370 = arith.mulf %369, %367 : vector<8x512xf32>
      %371 = arith.addf %368, %370 : vector<8x512xf32>
      %c0_8 = arith.constant 0 : index
      %372 = arith.index_cast %2 : i32 to index
      %373 = vector.load %arg6[%c0_8, %372] : memref<8x2048xf32, #tpu.memory_space<vmem>>, vector<8x512xf32>
      tpu.vector_store %arg6[%c0_8, %372], %371 {strides = array<i32>} : memref<8x2048xf32, #tpu.memory_space<vmem>>, vector<8x512xf32>,
    }
    %c4_i32_0 = arith.constant 4 : i32
    return
  }
  func.func @transform_0(%arg0: i32, %arg1: i32) -> i32 {
    %c0_i32 = arith.constant 0 : i32
    %c0_i32_0 = arith.constant 0 : i32
    return %c0_i32 : i32
  }
  func.func @transform_1(%arg0: i32, %arg1: i32) -> i32 {
    %c0_i32 = arith.constant 0 : i32
    %c0_i32_0 = arith.constant 0 : i32
    return %c0_i32 : i32
  }
  func.func @transform_2(%arg0: i32, %arg1: i32) -> (i32, i32) {
    %c0_i32 = arith.constant 0 : i32
    return %arg0, %arg1 : i32, i32
  }
  func.func @transform_3(%arg0: i32, %arg1: i32) -> (i32, i32) {
    %c0_i32 = arith.constant 0 : i32
    return %arg0, %arg1 : i32, i32
  }
  func.func @transform_4(%arg0: i32, %arg1: i32) -> (i32, i32) {
    %c0_i32 = arith.constant 0 : i32
    return %arg0, %arg1 : i32, i32
  }
}

</mosaic_0001>

<llo_original>
// kernel: drone_noise_gen.1
$region0: #{drone_noise_gen.1}
  #allocation0 [shape = 'u32[]', space=smem, size = 0x4, offset = 0x4, fixed_abs, tag = 'smem constant byte address 0x4 - core index']
  #allocation1 [shape = 'u32[72,128]{1,0:T(1,128)}', space=vmem, size = 0x9000, scoped, tag = 'internal scratch']
  %s0 = inlined_call_operand.vmem [shape: f32[2], index: 0, kind: input, shape index: {}]
  %s1 = inlined_call_operand.vmem [shape: f32[50], index: 1, kind: input, shape index: {}]
  %s2 = inlined_call_operand.vmem [shape: f32[8,4096], index: 2, kind: input, shape index: {}]
  %s3 = inlined_call_operand.vmem [shape: f32[8,4096], index: 3, kind: input, shape index: {}]
  %s4 = inlined_call_operand.vmem [shape: f32[8,4096], index: 4, kind: output, shape index: {}]
  %s5 = sld [smem:[#allocation0]]
  $region64: #{drone_noise_gen.1} parent=0
    _
  %s7 = ssub.s32 1, %s5
  %s8 = scalar_select 0, %s7, %s5
  $region1: #{drone_noise_gen.1} parent=0
    #allocation2 [shape = 'u8[512]{0}', space=smem, size = 0x200, scoped, tag = 'input window, operand 0, single buffered']
    #allocation3 [shape = 's32[2]{0}', space=sflag, size = 0x8, scoped, tag = 'scoped memory for drone_noise_gen.1']
    #allocation4 [shape = 'u8[512]{0}', space=smem, size = 0x200, scoped, tag = 'input window, operand 1, single buffered']
    #allocation5 [shape = 's32[1]{0}', space=sflag, size = 0x4, scoped, tag = 'scoped memory for drone_noise_gen.1']
    %9 = vsyncpa [#allocation3], 0
    %10 = vsyncpa [#allocation5], 0
    loop: start=0, step=1, limit=4
    $region2: #{drone_noise_gen.1} parent=1 // loop_pre_header
      _
    $region3: #{drone_noise_gen.1} parent=1 // loop_header
      %s12 = sphi 0, %s16
      %p13 = scmp.ge.s32.totalorder %s12, 4
      %s19 = sphi 0, %s31
      %s20 = sphi 0, %s27
      %s21 = sphi 0, %s19
      %s22 = sphi 0, %s20
      %s23 = sphi 0, %s21
      %s24 = sphi 0, %s22
      %s32 = sphi 0, %s32
      %s34 = sphi 0, %s32
      %s35 = sphi 0, %s34
      %s49 = sphi 0, %s35
      %s53 = sphi 0, %s53
      %s55 = sphi 0, %s53
      %s56 = sphi 0, %s55
      %s70 = sphi 0, %s56
      %s78 = sphi 0, %s80
      %s81 = sphi 0, %s78
      %s82 = sphi 0, %s81
      %s98 = sphi 0, %s82
      %s106 = sphi 0, %s108
      %s109 = sphi 0, %s106
      %s110 = sphi 0, %s109
      %s126 = sphi 0, %s110
      %s134 = sphi 0, %s136
      %s137 = sphi 0, %s134
      %s138 = sphi 0, %s137
      %s154 = sphi 0, %s138
    $region4: #{drone_noise_gen.1} parent=1 // loop_header_branch
      %15 = sbr.rel (%p13) target = $region8
    $region5: #{drone_noise_gen.1} parent=1 // loop_body
      %s17 = ssub.s32 %s12, 1
      %s18 = ssub.s32 %s12, 2
      %s25 = sadd.s32 1, %s20
      %p26 = scmp.ge.s32.totalorder %s25, 2
      %s27 = scalar_select %p26, 0, %s25
      %s28 = sadd.s32 1, %s19
      %s29 = scalar_select %p26, %s28, %s19
      %p30 = scmp.ge.s32.totalorder %s29, 1
      %s31 = scalar_select %p30, 0, %s29
      %s33 = sadd.s32 %s32, 1
      %p36 = scmp.eq.s32.totalorder %s12, 1
      %p37 = scmp.ne.s32.totalorder %s32, %s34
      %p38 = scmp.eq.s32.totalorder %s12, 0
      %p39 = por %p37, %p38
      %p40 = scmp.ne.s32.totalorder %s32, %s34
      %p41 = scmp.eq.s32.totalorder %s17, 1
      %p42 = por %p40, %p41
      %p43 = scmp.ne.s32.totalorder %s34, %s35
      %p44 = scmp.eq.s32.totalorder %s17, 0
      %p45 = por %p43, %p44
      %p46 = scmp.ne.s32.totalorder %s34, %s35
      %p47 = scmp.eq.s32.totalorder %s18, 1
      %p48 = por %p46, %p47
      %p50 = scmp.ne.s32.totalorder %s35, %s49
      %p51 = scmp.eq.s32.totalorder %s18, 0
      %p52 = por %p50, %p51
      %s54 = sadd.s32 %s53, 1
      %p57 = scmp.eq.s32.totalorder %s12, 1
      %p58 = scmp.ne.s32.totalorder %s53, %s55
      %p59 = scmp.eq.s32.totalorder %s12, 0
      %p60 = por %p58, %p59
      %p61 = scmp.ne.s32.totalorder %s53, %s55
      %p62 = scmp.eq.s32.totalorder %s17, 1
      %p63 = por %p61, %p62
      %p64 = scmp.ne.s32.totalorder %s55, %s56
      %p65 = scmp.eq.s32.totalorder %s17, 0
      %p66 = por %p64, %p65
      %p67 = scmp.ne.s32.totalorder %s55, %s56
      %p68 = scmp.eq.s32.totalorder %s18, 1
      %p69 = por %p67, %p68
      %p71 = scmp.ne.s32.totalorder %s56, %s70
      %p72 = scmp.eq.s32.totalorder %s18, 0
      %p73 = por %p71, %p72
      %s74 = ssub.s32 %s19, %s31
      %s75 = ssub.s32 %s20, %s27
      %s76 = sor.u32 %s74, %s75
      %p77 = scmp.eq.s32.totalorder %s76, 0
      %s79 = sadd.s32 %s78, 1
      %s80 = scalar_select %p77, %s78, %s79
      %p83 = pneg %p77
      %p84 = scmp.eq.s32.totalorder %s12, 1
      %p85 = por %p83, %p84
      %p86 = scmp.ne.s32.totalorder %s78, %s81
      %p87 = scmp.eq.s32.totalorder %s12, 0
      %p88 = por %p86, %p87
      %p89 = scmp.ne.s32.totalorder %s78, %s81
      %p90 = scmp.eq.s32.totalorder %s17, 1
      %p91 = por %p89, %p90
      %p92 = scmp.ne.s32.totalorder %s81, %s82
      %p93 = scmp.eq.s32.totalorder %s17, 0
      %p94 = por %p92, %p93
      %p95 = scmp.ne.s32.totalorder %s81, %s82
      %p96 = scmp.eq.s32.totalorder %s18, 1
      %p97 = por %p95, %p96
      %p99 = scmp.ne.s32.totalorder %s82, %s98
      %p100 = scmp.eq.s32.totalorder %s18, 0
      %p101 = por %p99, %p100
      %s102 = ssub.s32 %s19, %s31
      %s103 = ssub.s32 %s20, %s27
      %s104 = sor.u32 %s102, %s103
      %p105 = scmp.eq.s32.totalorder %s104, 0
      %s107 = sadd.s32 %s106, 1
      %s108 = scalar_select %p105, %s106, %s107
      %p111 = pneg %p105
      %p112 = scmp.eq.s32.totalorder %s12, 1
      %p113 = por %p111, %p112
      %p114 = scmp.ne.s32.totalorder %s106, %s109
      %p115 = scmp.eq.s32.totalorder %s12, 0
      %p116 = por %p114, %p115
      %p117 = scmp.ne.s32.totalorder %s106, %s109
      %p118 = scmp.eq.s32.totalorder %s17, 1
      %p119 = por %p117, %p118
      %p120 = scmp.ne.s32.totalorder %s109, %s110
      %p121 = scmp.eq.s32.totalorder %s17, 0
      %p122 = por %p120, %p121
      %p123 = scmp.ne.s32.totalorder %s109, %s110
      %p124 = scmp.eq.s32.totalorder %s18, 1
      %p125 = por %p123, %p124
      %p127 = scmp.ne.s32.totalorder %s110, %s126
      %p128 = scmp.eq.s32.totalorder %s18, 0
      %p129 = por %p127, %p128
      %s130 = ssub.s32 %s19, %s31
      %s131 = ssub.s32 %s20, %s27
      %s132 = sor.u32 %s130, %s131
      %p133 = scmp.eq.s32.totalorder %s132, 0
      %s135 = sadd.s32 %s134, 1
      %s136 = scalar_select %p133, %s134, %s135
      %p139 = pneg %p133
      %p140 = scmp.eq.s32.totalorder %s12, 1
      %p141 = por %p139, %p140
      %p142 = scmp.ne.s32.totalorder %s134, %s137
      %p143 = scmp.eq.s32.totalorder %s12, 0
      %p144 = por %p142, %p143
      %p145 = scmp.ne.s32.totalorder %s134, %s137
      %p146 = scmp.eq.s32.totalorder %s17, 1
      %p147 = por %p145, %p146
      %p148 = scmp.ne.s32.totalorder %s137, %s138
      %p149 = scmp.eq.s32.totalorder %s17, 0
      %p150 = por %p148, %p149
      %p151 = scmp.ne.s32.totalorder %s137, %s138
      %p152 = scmp.eq.s32.totalorder %s18, 1
      %p153 = por %p151, %p152
      %p155 = scmp.ne.s32.totalorder %s138, %s154
      %p156 = scmp.eq.s32.totalorder %s18, 0
      %p157 = por %p155, %p156
      %p158 = scmp.le.s32.totalorder 1, %s12
      %p159 = scmp.lt.s32.totalorder %s12, 3
      %p160 = pnand %p158, %p159
      %p161 = pneg %p160
      // Predicated region
      $region9: #{drone_noise_gen.1} parent=5 // pred_check
        _
      $region10: #{drone_noise_gen.1} parent=5 // pred_check_branch
        %163 = sbr.rel (%p160) target = $region12
      $region11: #{drone_noise_gen.1} parent=5 // pred_region
        %s164 = ssub.s32 %s12, 1
        // Predicated region
        $region13: #{drone_noise_gen.1} parent=11 // pred_check
          %p165 = pneg %p45
        $region14: #{drone_noise_gen.1} parent=11 // pred_check_branch
          %167 = sbr.rel (%p165) target = $region16
        $region15: #{drone_noise_gen.1} parent=11 // pred_region
          %169 = vsyncadd [#allocation3], 0
          %s171 = sshll.u32 %s0, 4
          %s172 = int_to_ptr.vmem [resolvable:$true] %s171
          %174 = dma.vmem_to_smem %s172, 16, [#allocation2], [#allocation3]
        $region16: #{drone_noise_gen.1} parent=11 // pred_fallthru
          _
        // Predicated region
        $region17: #{drone_noise_gen.1} parent=11 // pred_check
          %p175 = pneg %p66
        $region18: #{drone_noise_gen.1} parent=11 // pred_check_branch
          %177 = sbr.rel (%p175) target = $region20
        $region19: #{drone_noise_gen.1} parent=11 // pred_region
          %179 = vsyncadd [#allocation5], 0
          %s181 = sshll.u32 %s1, 4
          %s182 = int_to_ptr.vmem [resolvable:$true] %s181
          %184 = dma.vmem_to_smem %s182, 16, [#allocation4], [#allocation5]
        $region20: #{drone_noise_gen.1} parent=11 // pred_fallthru
          _
      $region12: #{drone_noise_gen.1} parent=5 // pred_fallthru
        _
      %p185 = scmp.lt.s32.totalorder %s12, 2
      // Predicated region
      $region21: #{drone_noise_gen.1} parent=5 // pred_check
        %p186 = pneg %p185
      $region22: #{drone_noise_gen.1} parent=5 // pred_check_branch
        %188 = sbr.rel (%p186) target = $region24
      $region23: #{drone_noise_gen.1} parent=5 // pred_region
        // Predicated region
        $region25: #{drone_noise_gen.1} parent=23 // pred_check
          %p189 = pneg %p88
        $region26: #{drone_noise_gen.1} parent=23 // pred_check_branch
          %191 = sbr.rel (%p189) target = $region28
        $region27: #{drone_noise_gen.1} parent=23 // pred_region
          %s192 = smul.u32 16, %s20
          %p193 = scmp.lt.s32.totalorder %s19, 0
          %s194 = scalar_select %p193, %s19, 0
          %p195 = scmp.lt.s32.totalorder %s192, 31
          %s196 = scalar_select %p195, %s192, 31
          %s197 = smul.addr %s194, 32
          %s198 = sadd.s32 %s196, %s197
          %s199 = smul.addr %s198, 8
          %s200 = scalar_lea.vmem %s2, %s199
          %s201 = smul.u32 16, %s20
        $region28: #{drone_noise_gen.1} parent=23 // pred_fallthru
          _
        // Predicated region
        $region29: #{drone_noise_gen.1} parent=23 // pred_check
          %p202 = pneg %p116
        $region30: #{drone_noise_gen.1} parent=23 // pred_check_branch
          %204 = sbr.rel (%p202) target = $region32
        $region31: #{drone_noise_gen.1} parent=23 // pred_region
          %s205 = smul.u32 16, %s20
          %p206 = scmp.lt.s32.totalorder %s19, 0
          %s207 = scalar_select %p206, %s19, 0
          %p208 = scmp.lt.s32.totalorder %s205, 31
          %s209 = scalar_select %p208, %s205, 31
          %s210 = smul.addr %s207, 32
          %s211 = sadd.s32 %s209, %s210
          %s212 = smul.addr %s211, 8
          %s213 = scalar_lea.vmem %s3, %s212
          %s214 = smul.u32 16, %s20
        $region32: #{drone_noise_gen.1} parent=23 // pred_fallthru
          _
      $region24: #{drone_noise_gen.1} parent=5 // pred_fallthru
        _
      %p215 = scmp.le.s32.totalorder 1, %s12
      %p216 = scmp.lt.s32.totalorder %s12, 3
      %p217 = pnand %p215, %p216
      %p218 = pneg %p217
      // Predicated region
      $region33: #{drone_noise_gen.1} parent=5 // pred_check
        _
      $region34: #{drone_noise_gen.1} parent=5 // pred_check_branch
        %220 = sbr.rel (%p217) target = $region36
      $region35: #{drone_noise_gen.1} parent=5 // pred_region
        %s221 = ssub.s32 %s12, 1
        // Predicated region
        $region37: #{drone_noise_gen.1} parent=35 // pred_check
          %p222 = pneg %p45
        $region38: #{drone_noise_gen.1} parent=35 // pred_check_branch
          %224 = sbr.rel (%p222) target = $region40
        $region39: #{drone_noise_gen.1} parent=35 // pred_region
          %226 = dma.done [#allocation3], 16
        $region40: #{drone_noise_gen.1} parent=35 // pred_fallthru
          _
        // Predicated region
        $region41: #{drone_noise_gen.1} parent=35 // pred_check
          %p227 = pneg %p66
        $region42: #{drone_noise_gen.1} parent=35 // pred_check_branch
          %229 = sbr.rel (%p227) target = $region44
        $region43: #{drone_noise_gen.1} parent=35 // pred_region
          %231 = dma.done [#allocation5], 16
        $region44: #{drone_noise_gen.1} parent=35 // pred_fallthru
          _
        %232 = sfence
        %p233 = pneg %p45
        %p234 = pneg %p42
        %p235 = pneg %p66
        %p236 = pneg %p63
        %s237 = smul.u32 16, %s22
        %p238 = scmp.lt.s32.totalorder %s21, 0
        %s239 = scalar_select %p238, %s21, 0
        %p240 = scmp.lt.s32.totalorder %s237, 31
        %s241 = scalar_select %p240, %s237, 31
        %s242 = smul.addr %s239, 32
        %s243 = sadd.s32 %s241, %s242
        %s244 = smul.addr %s243, 8
        %s245 = scalar_lea.vmem %s2, %s244
        %p246 = pneg %p94
        %p247 = pneg %p91
        %s248 = smul.u32 16, %s22
        %p249 = scmp.lt.s32.totalorder %s21, 0
        %s250 = scalar_select %p249, %s21, 0
        %p251 = scmp.lt.s32.totalorder %s248, 31
        %s252 = scalar_select %p251, %s248, 31
        %s253 = smul.addr %s250, 32
        %s254 = sadd.s32 %s252, %s253
        %s255 = smul.addr %s254, 8
        %s256 = scalar_lea.vmem %s3, %s255
        %p257 = pneg %p122
        %p258 = pneg %p119
        %p259 = pneg %p150
        %p260 = pneg %p147
        %s261 = smul.u32 16, %s22
        %p262 = scmp.lt.s32.totalorder %s21, 0
        %s263 = scalar_select %p262, %s21, 0
        %p264 = scmp.lt.s32.totalorder %s261, 31
        %s265 = scalar_select %p264, %s261, 31
        %s266 = smul.addr %s263, 32
        %s267 = sadd.s32 %s265, %s266
        %s268 = smul.addr %s267, 8
        %s269 = scalar_lea.vmem %s4, %s268
        %s270 = smul.u32 16, %s22
        %p271 = scmp.lt.s32.totalorder %s21, 0
        %s272 = scalar_select %p271, %s21, 0
        %p273 = scmp.lt.s32.totalorder %s270, 31
        %s274 = scalar_select %p273, %s270, 31
        %s275 = smul.addr %s272, 32
        %s276 = sadd.s32 %s274, %s275
        %s277 = smul.addr %s276, 8
        %s278 = scalar_lea.vmem %s2, %s277
        %s279 = smul.u32 16, %s22
        %s280 = smul.u32 16, %s22
        %p281 = scmp.lt.s32.totalorder %s21, 0
        %s282 = scalar_select %p281, %s21, 0
        %p283 = scmp.lt.s32.totalorder %s280, 31
        %s284 = scalar_select %p283, %s280, 31
        %s285 = smul.addr %s282, 32
        %s286 = sadd.s32 %s284, %s285
        %s287 = smul.addr %s286, 8
        %s288 = scalar_lea.vmem %s3, %s287
        %s289 = smul.u32 16, %s22
        %s290 = smul.u32 16, %s22
        %p291 = scmp.lt.s32.totalorder %s21, 0
        %s292 = scalar_select %p291, %s21, 0
        %p293 = scmp.lt.s32.totalorder %s290, 31
        %s294 = scalar_select %p293, %s290, 31
        %s295 = smul.addr %s292, 32
        %s296 = sadd.s32 %s294, %s295
        %s297 = smul.addr %s296, 8
        %s298 = scalar_lea.vmem %s4, %s297
        %s299 = smul.u32 16, %s22
        loop: start=0, step=1, limit=4
        $region45: #{drone_noise_gen.1} parent=35 // loop_pre_header
          _
        $region46: #{drone_noise_gen.1} parent=35 // loop_header
          %s301 = sphi 0, %s305
          %p302 = scmp.ge.s32.totalorder %s301, 4
        $region47: #{drone_noise_gen.1} parent=35 // loop_header_branch
          %304 = sbr.rel (%p302) target = $region51
        $region48: #{drone_noise_gen.1} parent=35 // loop_body
          %s306 = smul.u32 %s301, 512
          %s307 = sshra.s32 %s306, 7
          %s308 = sand.u32 %s306, 127
          %s309 = smul.addr %s307, 8
          %s310 = scalar_lea.vmem %s278, %s309
          %v311 = vld [vmem:[%s310] sm:$0xff]
          %v312 = vld [vmem:[%s310 + $0x8] sm:$0xff]
          %v313 = vld [vmem:[%s310 + $0x10] sm:$0xff]
          %v314 = vld [vmem:[%s310 + $0x18] sm:$0xff]
          %v315 = vand.u32 2147483647, %v311
          %vm316 = vcmp.le.f32.partialorder %v315, 0.7853982
          %vm317 = vcmp.lt.s32.totalorder %v311, 0
          %v318 = vand.u32 %v311, 2139095040
          %v319 = vshrl.u32 %v318, 23
          %v320 = vsub.s32 %v319, 127
          %v321 = vand.u32 2147483647, %v311
          %v322 = vand.u32 %v321, 8388607
          %v323 = vor.u32 %v322, 8388608
          %v324 = vsub.s32 0, %v323
          %v325 = vadd.s32 %v320, 1
          %vm326 = vcmp.gt.s32.totalorder %v325, 0
          %v327 = vsel %vm326, %v325, 0
          %v328 = vshrl.u32 %v327, 5
          %v329 = vand.u32 %v327, 31
          %v330 = vsub.s32 32, %v329
          %v331 = vshrl.u32 683565275, %v330
          %v332 = vshll.u32 683565275, %v329
          %v333 = vshrl.u32 2475754826, %v330
          %v334 = vor.u32 %v332, %v333
          %v335 = vshll.u32 2475754826, %v329
          %v336 = vshrl.u32 2131351028, %v330
          %v337 = vor.u32 %v335, %v336
          %v338 = vshll.u32 2131351028, %v329
          %v339 = vshrl.u32 2102212464, %v330
          %v340 = vor.u32 %v338, %v339
          %v341 = vshll.u32 2102212464, %v329
          %v342 = vshrl.u32 920167782, %v330
          %v343 = vor.u32 %v341, %v342
          %v344 = vshll.u32 920167782, %v329
          %v345 = vshrl.u32 1326507024, %v330
          %v346 = vor.u32 %v344, %v345
          %vm347 = vcmp.lt.s32.totalorder %v328, 1
          %vm348 = vcmp.lt.s32.totalorder %v328, 2
          %vm349 = vcmp.lt.s32.totalorder %v328, 3
          %vm350 = vcmp.lt.s32.totalorder %v328, 4
          %v351 = vsel %vm347, %v331, %v334
          %v352 = vsel %vm350, %v340, 2102212464
          %v353 = vsel %vm349, %v337, %v352
          %v354 = vsel %vm348, %v351, %v353
          %v355 = vsel %vm347, %v334, %v337
          %v356 = vsel %vm350, %v343, 920167782
          %v357 = vsel %vm349, %v340, %v356
          %v358 = vsel %vm348, %v355, %v357
          %v359 = vsel %vm347, %v337, %v340
          %v360 = vsel %vm350, %v346, 1326507024
          %v361 = vsel %vm349, %v343, %v360
          %v362 = vsel %vm348, %v359, %v361
          %v363 = vshll.u32 %v323, 8
          %v364 = vand.u32 %v363, 65535
          %v365 = vshrl.u32 %v363, 16
          %v366 = vand.u32 %v362, 65535
          %v367 = vshrl.u32 %v362, 16
          %v368 = vmul.u32 %v364, %v366
          %v369 = vmul.u32 %v364, %v367
          %v370 = vmul.u32 %v365, %v366
          %v371 = vmul.u32 %v365, %v367
          %v372 = vshll.u32 %v369, 16
          %v373 = vshrl.u32 %v369, 16
          %v374 = vshll.u32 %v370, 16
          %v375 = vshrl.u32 %v370, 16
          %vm376 = vc.u32 %v368, %v372
          %v377 = vsel %vm376, 1, 0
          %v378 = vadd.s32 %v368, %v372
          %v379 = vadd.s32 %v371, %v377
          %vm380 = vc.u32 %v378, %v374
          %v381 = vsel %vm380, 1, 0
          %v382 = vadd.s32 %v378, %v374
          %v383 = vadd.s32 %v379, %v381
          %v384 = vadd.s32 %v383, %v373
          %v385 = vadd.s32 %v384, %v375
          %v386 = vand.u32 %v363, 65535
          %v387 = vshrl.u32 %v363, 16
          %v388 = vand.u32 %v358, 65535
          %v389 = vshrl.u32 %v358, 16
          %v390 = vmul.u32 %v386, %v388
          %v391 = vmul.u32 %v386, %v389
          %v392 = vmul.u32 %v387, %v388
          %v393 = vmul.u32 %v387, %v389
          %v394 = vshll.u32 %v391, 16
          %v395 = vshrl.u32 %v391, 16
          %v396 = vshll.u32 %v392, 16
          %v397 = vshrl.u32 %v392, 16
          %vm398 = vc.u32 %v390, %v394
          %v399 = vsel %vm398, 1, 0
          %v400 = vadd.s32 %v390, %v394
          %v401 = vadd.s32 %v393, %v399
          %vm402 = vc.u32 %v400, %v396
          %v403 = vsel %vm402, 1, 0
          %v404 = vadd.s32 %v400, %v396
          %v405 = vadd.s32 %v401, %v403
          %v406 = vadd.s32 %v405, %v395
          %v407 = vadd.s32 %v406, %v397
          %v408 = vmul.u32 %v363, %v354
          %v409 = vadd.s32 %v385, %v404
          %vm410 = vc.u32 %v385, %v404
          %v411 = vadd.s32 %v407, 1
          %v412 = vsel %vm410, %v411, %v407
          %v413 = vadd.s32 %v408, %v412
          %v414 = vadd.s32 %v413, 536870912
          %v415 = vshrl.u32 %v414, 30
          %v416 = vshll.u32 %v415, 30
          %v417 = vsub.s32 %v413, %v416
          %vm418 = vcmp.lt.s32.totalorder %v417, 0
          %v419 = vsub.s32 0, %v417
          %v420 = vsel %vm418, %v419, %v417
          %v421 = vclz %v420
          %v422 = vsub.s32 %v421, 2
          %vm423 = vcmp.gt.s32.totalorder 0, %v422
          %v424 = vsel %vm423, 0, %v422
          %v425 = vsub.s32 32, %v424
          %v426 = vshll.u32 %v417, %v424
          %v427 = vshrl.u32 %v409, %v425
          %v428 = vor.u32 %v426, %v427
          %v429 = vsub.s32 4294967266, %v424
          %v430 = vadd.s32 %v429, 127
          %v431 = vshll.u32 %v430, 23
          %v432 = vor.u32 4788187, %v431
          %v433 = vand.u32 2147483647, %v432
          %v435 = vcvt.s32.f32 %v428
          %v436 = vmul.f32 %v435, %v433
          %v437 = vxor.u32 %v436, 2147483648
          %v438 = vsel %vm317, %v437, %v436
          %v439 = vsub.s32 4, %v415
          %v440 = vsel %vm317, %v439, %v415
          %v441 = vsel %vm316, %v311, %v438
          %v442 = vsel %vm316, 0, %v440
          %v443 = vmul.f32 %v441, %v441
          %v444 = vmul.f32 %v443, -0.001358992
          %v445 = vadd.f32 %v444, 0.041655596
          %v446 = vmul.f32 %v443, %v445
          %v447 = vadd.f32 %v446, -0.4999988
          %v448 = vmul.f32 %v443, %v447
          %v449 = vadd.f32 1.0, %v448
          %v450 = vmul.f32 %v441, %v441
          %v451 = vmul.f32 %v450, -0.00019511016
          %v452 = vadd.f32 %v451, 0.008332121
          %v453 = vmul.f32 %v450, %v452
          %v454 = vadd.f32 %v453, -0.16666654
          %v455 = vmul.f32 %v450, %v454
          %v456 = vadd.f32 %v455, 1.0
          %v457 = vmul.f32 %v456, %v441
          %vm458 = vweird.f32 %v311
          %v459 = vadd.s32 %v442, 3
          %v460 = vand.u32 %v459, 3
          %vm461 = vcmp.lt.s32.totalorder %v460, 2
          %vm462 = vcmp.eq.s32.totalorder %v460, 0
          %v463 = vxor.u32 %v457, 2147483648
          %v464 = vsel %vm462, %v449, %v463
          %vm465 = vcmp.eq.s32.totalorder %v460, 2
          %v466 = vxor.u32 %v449, 2147483648
          %v467 = vsel %vm465, %v466, %v457
          %v468 = vsel %vm461, %v464, %v467
          %v469 = vsel %vm458, nan, %v468
          %v470 = vand.u32 2147483647, %v312
          %vm471 = vcmp.le.f32.partialorder %v470, 0.7853982
          %vm472 = vcmp.lt.s32.totalorder %v312, 0
          %v473 = vand.u32 %v312, 2139095040
          %v474 = vshrl.u32 %v473, 23
          %v475 = vsub.s32 %v474, 127
          %v476 = vand.u32 2147483647, %v312
          %v477 = vand.u32 %v476, 8388607
          %v478 = vor.u32 %v477, 8388608
          %v479 = vsub.s32 0, %v478
          %v480 = vadd.s32 %v475, 1
          %vm481 = vcmp.gt.s32.totalorder %v480, 0
          %v482 = vsel %vm481, %v480, 0
          %v483 = vshrl.u32 %v482, 5
          %v484 = vand.u32 %v482, 31
          %v485 = vsub.s32 32, %v484
          %v486 = vshrl.u32 683565275, %v485
          %v487 = vshll.u32 683565275, %v484
          %v488 = vshrl.u32 2475754826, %v485
          %v489 = vor.u32 %v487, %v488
          %v490 = vshll.u32 2475754826, %v484
          %v491 = vshrl.u32 2131351028, %v485
          %v492 = vor.u32 %v490, %v491
          %v493 = vshll.u32 2131351028, %v484
          %v494 = vshrl.u32 2102212464, %v485
          %v495 = vor.u32 %v493, %v494
          %v496 = vshll.u32 2102212464, %v484
          %v497 = vshrl.u32 920167782, %v485
          %v498 = vor.u32 %v496, %v497
          %v499 = vshll.u32 920167782, %v484
          %v500 = vshrl.u32 1326507024, %v485
          %v501 = vor.u32 %v499, %v500
          %vm502 = vcmp.lt.s32.totalorder %v483, 1
          %vm503 = vcmp.lt.s32.totalorder %v483, 2
          %vm504 = vcmp.lt.s32.totalorder %v483, 3
          %vm505 = vcmp.lt.s32.totalorder %v483, 4
          %v506 = vsel %vm502, %v486, %v489
          %v507 = vsel %vm505, %v495, 2102212464
          %v508 = vsel %vm504, %v492, %v507
          %v509 = vsel %vm503, %v506, %v508
          %v510 = vsel %vm502, %v489, %v492
          %v511 = vsel %vm505, %v498, 920167782
          %v512 = vsel %vm504, %v495, %v511
          %v513 = vsel %vm503, %v510, %v512
          %v514 = vsel %vm502, %v492, %v495
          %v515 = vsel %vm505, %v501, 1326507024
          %v516 = vsel %vm504, %v498, %v515
          %v517 = vsel %vm503, %v514, %v516
          %v518 = vshll.u32 %v478, 8
          %v519 = vand.u32 %v518, 65535
          %v520 = vshrl.u32 %v518, 16
          %v521 = vand.u32 %v517, 65535
          %v522 = vshrl.u32 %v517, 16
          %v523 = vmul.u32 %v519, %v521
          %v524 = vmul.u32 %v519, %v522
          %v525 = vmul.u32 %v520, %v521
          %v526 = vmul.u32 %v520, %v522
          %v527 = vshll.u32 %v524, 16
          %v528 = vshrl.u32 %v524, 16
          %v529 = vshll.u32 %v525, 16
          %v530 = vshrl.u32 %v525, 16
          %vm531 = vc.u32 %v523, %v527
          %v532 = vsel %vm531, 1, 0
          %v533 = vadd.s32 %v523, %v527
          %v534 = vadd.s32 %v526, %v532
          %vm535 = vc.u32 %v533, %v529
          %v536 = vsel %vm535, 1, 0
          %v537 = vadd.s32 %v533, %v529
          %v538 = vadd.s32 %v534, %v536
          %v539 = vadd.s32 %v538, %v528
          %v540 = vadd.s32 %v539, %v530
          %v541 = vand.u32 %v518, 65535
          %v542 = vshrl.u32 %v518, 16
          %v543 = vand.u32 %v513, 65535
          %v544 = vshrl.u32 %v513, 16
          %v545 = vmul.u32 %v541, %v543
          %v546 = vmul.u32 %v541, %v544
          %v547 = vmul.u32 %v542, %v543
          %v548 = vmul.u32 %v542, %v544
          %v549 = vshll.u32 %v546, 16
          %v550 = vshrl.u32 %v546, 16
          %v551 = vshll.u32 %v547, 16
          %v552 = vshrl.u32 %v547, 16
          %vm553 = vc.u32 %v545, %v549
          %v554 = vsel %vm553, 1, 0
          %v555 = vadd.s32 %v545, %v549
          %v556 = vadd.s32 %v548, %v554
          %vm557 = vc.u32 %v555, %v551
          %v558 = vsel %vm557, 1, 0
          %v559 = vadd.s32 %v555, %v551
          %v560 = vadd.s32 %v556, %v558
          %v561 = vadd.s32 %v560, %v550
          %v562 = vadd.s32 %v561, %v552
          %v563 = vmul.u32 %v518, %v509
          %v564 = vadd.s32 %v540, %v559
          %vm565 = vc.u32 %v540, %v559
          %v566 = vadd.s32 %v562, 1
          %v567 = vsel %vm565, %v566, %v562
          %v568 = vadd.s32 %v563, %v567
          %v569 = vadd.s32 %v568, 536870912
          %v570 = vshrl.u32 %v569, 30
          %v571 = vshll.u32 %v570, 30
          %v572 = vsub.s32 %v568, %v571
          %vm573 = vcmp.lt.s32.totalorder %v572, 0
          %v574 = vsub.s32 0, %v572
          %v575 = vsel %vm573, %v574, %v572
          %v576 = vclz %v575
          %v577 = vsub.s32 %v576, 2
          %vm578 = vcmp.gt.s32.totalorder 0, %v577
          %v579 = vsel %vm578, 0, %v577
          %v580 = vsub.s32 32, %v579
          %v581 = vshll.u32 %v572, %v579
          %v582 = vshrl.u32 %v564, %v580
          %v583 = vor.u32 %v581, %v582
          %v584 = vsub.s32 4294967266, %v579
          %v585 = vadd.s32 %v584, 127
          %v586 = vshll.u32 %v585, 23
          %v587 = vor.u32 4788187, %v586
          %v588 = vand.u32 2147483647, %v587
          %v590 = vcvt.s32.f32 %v583
          %v591 = vmul.f32 %v590, %v588
          %v592 = vxor.u32 %v591, 2147483648
          %v593 = vsel %vm472, %v592, %v591
          %v594 = vsub.s32 4, %v570
          %v595 = vsel %vm472, %v594, %v570
          %v596 = vsel %vm471, %v312, %v593
          %v597 = vsel %vm471, 0, %v595
          %v598 = vmul.f32 %v596, %v596
          %v599 = vmul.f32 %v598, -0.001358992
          %v600 = vadd.f32 %v599, 0.041655596
          %v601 = vmul.f32 %v598, %v600
          %v602 = vadd.f32 %v601, -0.4999988
          %v603 = vmul.f32 %v598, %v602
          %v604 = vadd.f32 1.0, %v603
          %v605 = vmul.f32 %v596, %v596
          %v606 = vmul.f32 %v605, -0.00019511016
          %v607 = vadd.f32 %v606, 0.008332121
          %v608 = vmul.f32 %v605, %v607
          %v609 = vadd.f32 %v608, -0.16666654
          %v610 = vmul.f32 %v605, %v609
          %v611 = vadd.f32 %v610, 1.0
          %v612 = vmul.f32 %v611, %v596
          %vm613 = vweird.f32 %v312
          %v614 = vadd.s32 %v597, 3
          %v615 = vand.u32 %v614, 3
          %vm616 = vcmp.lt.s32.totalorder %v615, 2
          %vm617 = vcmp.eq.s32.totalorder %v615, 0
          %v618 = vxor.u32 %v612, 2147483648
          %v619 = vsel %vm617, %v604, %v618
          %vm620 = vcmp.eq.s32.totalorder %v615, 2
          %v621 = vxor.u32 %v604, 2147483648
          %v622 = vsel %vm620, %v621, %v612
          %v623 = vsel %vm616, %v619, %v622
          %v624 = vsel %vm613, nan, %v623
          %v625 = vand.u32 2147483647, %v313
          %vm626 = vcmp.le.f32.partialorder %v625, 0.7853982
          %vm627 = vcmp.lt.s32.totalorder %v313, 0
          %v628 = vand.u32 %v313, 2139095040
          %v629 = vshrl.u32 %v628, 23
          %v630 = vsub.s32 %v629, 127
          %v631 = vand.u32 2147483647, %v313
          %v632 = vand.u32 %v631, 8388607
          %v633 = vor.u32 %v632, 8388608
          %v634 = vsub.s32 0, %v633
          %v635 = vadd.s32 %v630, 1
          %vm636 = vcmp.gt.s32.totalorder %v635, 0
          %v637 = vsel %vm636, %v635, 0
          %v638 = vshrl.u32 %v637, 5
          %v639 = vand.u32 %v637, 31
          %v640 = vsub.s32 32, %v639
          %v641 = vshrl.u32 683565275, %v640
          %v642 = vshll.u32 683565275, %v639
          %v643 = vshrl.u32 2475754826, %v640
          %v644 = vor.u32 %v642, %v643
          %v645 = vshll.u32 2475754826, %v639
          %v646 = vshrl.u32 2131351028, %v640
          %v647 = vor.u32 %v645, %v646
          %v648 = vshll.u32 2131351028, %v639
          %v649 = vshrl.u32 2102212464, %v640
          %v650 = vor.u32 %v648, %v649
          %v651 = vshll.u32 2102212464, %v639
          %v652 = vshrl.u32 920167782, %v640
          %v653 = vor.u32 %v651, %v652
          %v654 = vshll.u32 920167782, %v639
          %v655 = vshrl.u32 1326507024, %v640
          %v656 = vor.u32 %v654, %v655
          %vm657 = vcmp.lt.s32.totalorder %v638, 1
          %vm658 = vcmp.lt.s32.totalorder %v638, 2
          %vm659 = vcmp.lt.s32.totalorder %v638, 3
          %vm660 = vcmp.lt.s32.totalorder %v638, 4
          %v661 = vsel %vm657, %v641, %v644
          %v662 = vsel %vm660, %v650, 2102212464
          %v663 = vsel %vm659, %v647, %v662
          %v664 = vsel %vm658, %v661, %v663
          %v665 = vsel %vm657, %v644, %v647
          %v666 = vsel %vm660, %v653, 920167782
          %v667 = vsel %vm659, %v650, %v666
          %v668 = vsel %vm658, %v665, %v667
          %v669 = vsel %vm657, %v647, %v650
          %v670 = vsel %vm660, %v656, 1326507024
          %v671 = vsel %vm659, %v653, %v670
          %v672 = vsel %vm658, %v669, %v671
          %v673 = vshll.u32 %v633, 8
          %v674 = vand.u32 %v673, 65535
          %v675 = vshrl.u32 %v673, 16
          %v676 = vand.u32 %v672, 65535
          %v677 = vshrl.u32 %v672, 16
          %v678 = vmul.u32 %v674, %v676
          %v679 = vmul.u32 %v674, %v677
          %v680 = vmul.u32 %v675, %v676
          %v681 = vmul.u32 %v675, %v677
          %v682 = vshll.u32 %v679, 16
          %v683 = vshrl.u32 %v679, 16
          %v684 = vshll.u32 %v680, 16
          %v685 = vshrl.u32 %v680, 16
          %vm686 = vc.u32 %v678, %v682
          %v687 = vsel %vm686, 1, 0
          %v688 = vadd.s32 %v678, %v682
          %v689 = vadd.s32 %v681, %v687
          %vm690 = vc.u32 %v688, %v684
          %v691 = vsel %vm690, 1, 0
          %v692 = vadd.s32 %v688, %v684
          %v693 = vadd.s32 %v689, %v691
          %v694 = vadd.s32 %v693, %v683
          %v695 = vadd.s32 %v694, %v685
          %v696 = vand.u32 %v673, 65535
          %v697 = vshrl.u32 %v673, 16
          %v698 = vand.u32 %v668, 65535
          %v699 = vshrl.u32 %v668, 16
          %v700 = vmul.u32 %v696, %v698
          %v701 = vmul.u32 %v696, %v699
          %v702 = vmul.u32 %v697, %v698
          %v703 = vmul.u32 %v697, %v699
          %v704 = vshll.u32 %v701, 16
          %v705 = vshrl.u32 %v701, 16
          %v706 = vshll.u32 %v702, 16
          %v707 = vshrl.u32 %v702, 16
          %vm708 = vc.u32 %v700, %v704
          %v709 = vsel %vm708, 1, 0
          %v710 = vadd.s32 %v700, %v704
          %v711 = vadd.s32 %v703, %v709
          %vm712 = vc.u32 %v710, %v706
          %v713 = vsel %vm712, 1, 0
          %v714 = vadd.s32 %v710, %v706
          %v715 = vadd.s32 %v711, %v713
          %v716 = vadd.s32 %v715, %v705
          %v717 = vadd.s32 %v716, %v707
          %v718 = vmul.u32 %v673, %v664
          %v719 = vadd.s32 %v695, %v714
          %vm720 = vc.u32 %v695, %v714
          %v721 = vadd.s32 %v717, 1
          %v722 = vsel %vm720, %v721, %v717
          %v723 = vadd.s32 %v718, %v722
          %v724 = vadd.s32 %v723, 536870912
          %v725 = vshrl.u32 %v724, 30
          %v726 = vshll.u32 %v725, 30
          %v727 = vsub.s32 %v723, %v726
          %vm728 = vcmp.lt.s32.totalorder %v727, 0
          %v729 = vsub.s32 0, %v727
          %v730 = vsel %vm728, %v729, %v727
          %v731 = vclz %v730
          %v732 = vsub.s32 %v731, 2
          %vm733 = vcmp.gt.s32.totalorder 0, %v732
          %v734 = vsel %vm733, 0, %v732
          %v735 = vsub.s32 32, %v734
          %v736 = vshll.u32 %v727, %v734
          %v737 = vshrl.u32 %v719, %v735
          %v738 = vor.u32 %v736, %v737
          %v739 = vsub.s32 4294967266, %v734
          %v740 = vadd.s32 %v739, 127
          %v741 = vshll.u32 %v740, 23
          %v742 = vor.u32 4788187, %v741
          %v743 = vand.u32 2147483647, %v742
          %v745 = vcvt.s32.f32 %v738
          %v746 = vmul.f32 %v745, %v743
          %v747 = vxor.u32 %v746, 2147483648
          %v748 = vsel %vm627, %v747, %v746
          %v749 = vsub.s32 4, %v725
          %v750 = vsel %vm627, %v749, %v725
          %v751 = vsel %vm626, %v313, %v748
          %v752 = vsel %vm626, 0, %v750
          %v753 = vmul.f32 %v751, %v751
          %v754 = vmul.f32 %v753, -0.001358992
          %v755 = vadd.f32 %v754, 0.041655596
          %v756 = vmul.f32 %v753, %v755
          %v757 = vadd.f32 %v756, -0.4999988
          %v758 = vmul.f32 %v753, %v757
          %v759 = vadd.f32 1.0, %v758
          %v760 = vmul.f32 %v751, %v751
          %v761 = vmul.f32 %v760, -0.00019511016
          %v762 = vadd.f32 %v761, 0.008332121
          %v763 = vmul.f32 %v760, %v762
          %v764 = vadd.f32 %v763, -0.16666654
          %v765 = vmul.f32 %v760, %v764
          %v766 = vadd.f32 %v765, 1.0
          %v767 = vmul.f32 %v766, %v751
          %vm768 = vweird.f32 %v313
          %v769 = vadd.s32 %v752, 3
          %v770 = vand.u32 %v769, 3
          %vm771 = vcmp.lt.s32.totalorder %v770, 2
          %vm772 = vcmp.eq.s32.totalorder %v770, 0
          %v773 = vxor.u32 %v767, 2147483648
          %v774 = vsel %vm772, %v759, %v773
          %vm775 = vcmp.eq.s32.totalorder %v770, 2
          %v776 = vxor.u32 %v759, 2147483648
          %v777 = vsel %vm775, %v776, %v767
          %v778 = vsel %vm771, %v774, %v777
          %v779 = vsel %vm768, nan, %v778
          %v780 = vand.u32 2147483647, %v314
          %vm781 = vcmp.le.f32.partialorder %v780, 0.7853982
          %vm782 = vcmp.lt.s32.totalorder %v314, 0
          %v783 = vand.u32 %v314, 2139095040
          %v784 = vshrl.u32 %v783, 23
          %v785 = vsub.s32 %v784, 127
          %v786 = vand.u32 2147483647, %v314
          %v787 = vand.u32 %v786, 8388607
          %v788 = vor.u32 %v787, 8388608
          %v789 = vsub.s32 0, %v788
          %v790 = vadd.s32 %v785, 1
          %vm791 = vcmp.gt.s32.totalorder %v790, 0
          %v792 = vsel %vm791, %v790, 0
          %v793 = vshrl.u32 %v792, 5
          %v794 = vand.u32 %v792, 31
          %v795 = vsub.s32 32, %v794
          %v796 = vshrl.u32 683565275, %v795
          %v797 = vshll.u32 683565275, %v794
          %v798 = vshrl.u32 2475754826, %v795
          %v799 = vor.u32 %v797, %v798
          %v800 = vshll.u32 2475754826, %v794
          %v801 = vshrl.u32 2131351028, %v795
          %v802 = vor.u32 %v800, %v801
          %v803 = vshll.u32 2131351028, %v794
          %v804 = vshrl.u32 2102212464, %v795
          %v805 = vor.u32 %v803, %v804
          %v806 = vshll.u32 2102212464, %v794
          %v807 = vshrl.u32 920167782, %v795
          %v808 = vor.u32 %v806, %v807
          %v809 = vshll.u32 920167782, %v794
          %v810 = vshrl.u32 1326507024, %v795
          %v811 = vor.u32 %v809, %v810
          %vm812 = vcmp.lt.s32.totalorder %v793, 1
          %vm813 = vcmp.lt.s32.totalorder %v793, 2
          %vm814 = vcmp.lt.s32.totalorder %v793, 3
          %vm815 = vcmp.lt.s32.totalorder %v793, 4
          %v816 = vsel %vm812, %v796, %v799
          %v817 = vsel %vm815, %v805, 2102212464
          %v818 = vsel %vm814, %v802, %v817
          %v819 = vsel %vm813, %v816, %v818
          %v820 = vsel %vm812, %v799, %v802
          %v821 = vsel %vm815, %v808, 920167782
          %v822 = vsel %vm814, %v805, %v821
          %v823 = vsel %vm813, %v820, %v822
          %v824 = vsel %vm812, %v802, %v805
          %v825 = vsel %vm815, %v811, 1326507024
          %v826 = vsel %vm814, %v808, %v825
          %v827 = vsel %vm813, %v824, %v826
          %v828 = vshll.u32 %v788, 8
          %v829 = vand.u32 %v828, 65535
          %v830 = vshrl.u32 %v828, 16
          %v831 = vand.u32 %v827, 65535
          %v832 = vshrl.u32 %v827, 16
          %v833 = vmul.u32 %v829, %v831
          %v834 = vmul.u32 %v829, %v832
          %v835 = vmul.u32 %v830, %v831
          %v836 = vmul.u32 %v830, %v832
          %v837 = vshll.u32 %v834, 16
          %v838 = vshrl.u32 %v834, 16
          %v839 = vshll.u32 %v835, 16
          %v840 = vshrl.u32 %v835, 16
          %vm841 = vc.u32 %v833, %v837
          %v842 = vsel %vm841, 1, 0
          %v843 = vadd.s32 %v833, %v837
          %v844 = vadd.s32 %v836, %v842
          %vm845 = vc.u32 %v843, %v839
          %v846 = vsel %vm845, 1, 0
          %v847 = vadd.s32 %v843, %v839
          %v848 = vadd.s32 %v844, %v846
          %v849 = vadd.s32 %v848, %v838
          %v850 = vadd.s32 %v849, %v840
          %v851 = vand.u32 %v828, 65535
          %v852 = vshrl.u32 %v828, 16
          %v853 = vand.u32 %v823, 65535
          %v854 = vshrl.u32 %v823, 16
          %v855 = vmul.u32 %v851, %v853
          %v856 = vmul.u32 %v851, %v854
          %v857 = vmul.u32 %v852, %v853
          %v858 = vmul.u32 %v852, %v854
          %v859 = vshll.u32 %v856, 16
          %v860 = vshrl.u32 %v856, 16
          %v861 = vshll.u32 %v857, 16
          %v862 = vshrl.u32 %v857, 16
          %vm863 = vc.u32 %v855, %v859
          %v864 = vsel %vm863, 1, 0
          %v865 = vadd.s32 %v855, %v859
          %v866 = vadd.s32 %v858, %v864
          %vm867 = vc.u32 %v865, %v861
          %v868 = vsel %vm867, 1, 0
          %v869 = vadd.s32 %v865, %v861
          %v870 = vadd.s32 %v866, %v868
          %v871 = vadd.s32 %v870, %v860
          %v872 = vadd.s32 %v871, %v862
          %v873 = vmul.u32 %v828, %v819
          %v874 = vadd.s32 %v850, %v869
          %vm875 = vc.u32 %v850, %v869
          %v876 = vadd.s32 %v872, 1
          %v877 = vsel %vm875, %v876, %v872
          %v878 = vadd.s32 %v873, %v877
          %v879 = vadd.s32 %v878, 536870912
          %v880 = vshrl.u32 %v879, 30
          %v881 = vshll.u32 %v880, 30
          %v882 = vsub.s32 %v878, %v881
          %vm883 = vcmp.lt.s32.totalorder %v882, 0
          %v884 = vsub.s32 0, %v882
          %v885 = vsel %vm883, %v884, %v882
          %v886 = vclz %v885
          %v887 = vsub.s32 %v886, 2
          %vm888 = vcmp.gt.s32.totalorder 0, %v887
          %v889 = vsel %vm888, 0, %v887
          %v890 = vsub.s32 32, %v889
          %v891 = vshll.u32 %v882, %v889
          %v892 = vshrl.u32 %v874, %v890
          %v893 = vor.u32 %v891, %v892
          %v894 = vsub.s32 4294967266, %v889
          %v895 = vadd.s32 %v894, 127
          %v896 = vshll.u32 %v895, 23
          %v897 = vor.u32 4788187, %v896
          %v898 = vand.u32 2147483647, %v897
          %v900 = vcvt.s32.f32 %v893
          %v901 = vmul.f32 %v900, %v898
          %v902 = vxor.u32 %v901, 2147483648
          %v903 = vsel %vm782, %v902, %v901
          %v904 = vsub.s32 4, %v880
          %v905 = vsel %vm782, %v904, %v880
          %v906 = vsel %vm781, %v314, %v903
          %v907 = vsel %vm781, 0, %v905
          %v908 = vmul.f32 %v906, %v906
          %v909 = vmul.f32 %v908, -0.001358992
          %v910 = vadd.f32 %v909, 0.041655596
          %v911 = vmul.f32 %v908, %v910
          %v912 = vadd.f32 %v911, -0.4999988
          %v913 = vmul.f32 %v908, %v912
          %v914 = vadd.f32 1.0, %v913
          %v915 = vmul.f32 %v906, %v906
          %v916 = vmul.f32 %v915, -0.00019511016
          %v917 = vadd.f32 %v916, 0.008332121
          %v918 = vmul.f32 %v915, %v917
          %v919 = vadd.f32 %v918, -0.16666654
          %v920 = vmul.f32 %v915, %v919
          %v921 = vadd.f32 %v920, 1.0
          %v922 = vmul.f32 %v921, %v906
          %vm923 = vweird.f32 %v314
          %v924 = vadd.s32 %v907, 3
          %v925 = vand.u32 %v924, 3
          %vm926 = vcmp.lt.s32.totalorder %v925, 2
          %vm927 = vcmp.eq.s32.totalorder %v925, 0
          %v928 = vxor.u32 %v922, 2147483648
          %v929 = vsel %vm927, %v914, %v928
          %vm930 = vcmp.eq.s32.totalorder %v925, 2
          %v931 = vxor.u32 %v914, 2147483648
          %v932 = vsel %vm930, %v931, %v922
          %v933 = vsel %vm926, %v929, %v932
          %v934 = vsel %vm923, nan, %v933
          %v935 = vand.u32 2147483647, %v311
          %vm936 = vcmp.le.f32.partialorder %v935, 0.7853982
          %vm937 = vcmp.lt.s32.totalorder %v311, 0
          %v938 = vand.u32 %v311, 2139095040
          %v939 = vshrl.u32 %v938, 23
          %v940 = vsub.s32 %v939, 127
          %v941 = vand.u32 2147483647, %v311
          %v942 = vand.u32 %v941, 8388607
          %v943 = vor.u32 %v942, 8388608
          %v944 = vsub.s32 0, %v943
          %v945 = vadd.s32 %v940, 1
          %vm946 = vcmp.gt.s32.totalorder %v945, 0
          %v947 = vsel %vm946, %v945, 0
          %v948 = vshrl.u32 %v947, 5
          %v949 = vand.u32 %v947, 31
          %v950 = vsub.s32 32, %v949
          %v951 = vshrl.u32 683565275, %v950
          %v952 = vshll.u32 683565275, %v949
          %v953 = vshrl.u32 2475754826, %v950
          %v954 = vor.u32 %v952, %v953
          %v955 = vshll.u32 2475754826, %v949
          %v956 = vshrl.u32 2131351028, %v950
          %v957 = vor.u32 %v955, %v956
          %v958 = vshll.u32 2131351028, %v949
          %v959 = vshrl.u32 2102212464, %v950
          %v960 = vor.u32 %v958, %v959
          %v961 = vshll.u32 2102212464, %v949
          %v962 = vshrl.u32 920167782, %v950
          %v963 = vor.u32 %v961, %v962
          %v964 = vshll.u32 920167782, %v949
          %v965 = vshrl.u32 1326507024, %v950
          %v966 = vor.u32 %v964, %v965
          %vm967 = vcmp.lt.s32.totalorder %v948, 1
          %vm968 = vcmp.lt.s32.totalorder %v948, 2
          %vm969 = vcmp.lt.s32.totalorder %v948, 3
          %vm970 = vcmp.lt.s32.totalorder %v948, 4
          %v971 = vsel %vm967, %v951, %v954
          %v972 = vsel %vm970, %v960, 2102212464
          %v973 = vsel %vm969, %v957, %v972
          %v974 = vsel %vm968, %v971, %v973
          %v975 = vsel %vm967, %v954, %v957
          %v976 = vsel %vm970, %v963, 920167782
          %v977 = vsel %vm969, %v960, %v976
          %v978 = vsel %vm968, %v975, %v977
          %v979 = vsel %vm967, %v957, %v960
          %v980 = vsel %vm970, %v966, 1326507024
          %v981 = vsel %vm969, %v963, %v980
          %v982 = vsel %vm968, %v979, %v981
          %v983 = vshll.u32 %v943, 8
          %v984 = vand.u32 %v983, 65535
          %v985 = vshrl.u32 %v983, 16
          %v986 = vand.u32 %v982, 65535
          %v987 = vshrl.u32 %v982, 16
          %v988 = vmul.u32 %v984, %v986
          %v989 = vmul.u32 %v984, %v987
          %v990 = vmul.u32 %v985, %v986
          %v991 = vmul.u32 %v985, %v987
          %v992 = vshll.u32 %v989, 16
          %v993 = vshrl.u32 %v989, 16
          %v994 = vshll.u32 %v990, 16
          %v995 = vshrl.u32 %v990, 16
          %vm996 = vc.u32 %v988, %v992
          %v997 = vsel %vm996, 1, 0
          %v998 = vadd.s32 %v988, %v992
          %v999 = vadd.s32 %v991, %v997
          %vm1000 = vc.u32 %v998, %v994
          %v1001 = vsel %vm1000, 1, 0
          %v1002 = vadd.s32 %v998, %v994
          %v1003 = vadd.s32 %v999, %v1001
          %v1004 = vadd.s32 %v1003, %v993
          %v1005 = vadd.s32 %v1004, %v995
          %v1006 = vand.u32 %v983, 65535
          %v1007 = vshrl.u32 %v983, 16
          %v1008 = vand.u32 %v978, 65535
          %v1009 = vshrl.u32 %v978, 16
          %v1010 = vmul.u32 %v1006, %v1008
          %v1011 = vmul.u32 %v1006, %v1009
          %v1012 = vmul.u32 %v1007, %v1008
          %v1013 = vmul.u32 %v1007, %v1009
          %v1014 = vshll.u32 %v1011, 16
          %v1015 = vshrl.u32 %v1011, 16
          %v1016 = vshll.u32 %v1012, 16
          %v1017 = vshrl.u32 %v1012, 16
          %vm1018 = vc.u32 %v1010, %v1014
          %v1019 = vsel %vm1018, 1, 0
          %v1020 = vadd.s32 %v1010, %v1014
          %v1021 = vadd.s32 %v1013, %v1019
          %vm1022 = vc.u32 %v1020, %v1016
          %v1023 = vsel %vm1022, 1, 0
          %v1024 = vadd.s32 %v1020, %v1016
          %v1025 = vadd.s32 %v1021, %v1023
          %v1026 = vadd.s32 %v1025, %v1015
          %v1027 = vadd.s32 %v1026, %v1017
          %v1028 = vmul.u32 %v983, %v974
          %v1029 = vadd.s32 %v1005, %v1024
          %vm1030 = vc.u32 %v1005, %v1024
          %v1031 = vadd.s32 %v1027, 1
          %v1032 = vsel %vm1030, %v1031, %v1027
          %v1033 = vadd.s32 %v1028, %v1032
          %v1034 = vadd.s32 %v1033, 536870912
          %v1035 = vshrl.u32 %v1034, 30
          %v1036 = vshll.u32 %v1035, 30
          %v1037 = vsub.s32 %v1033, %v1036
          %vm1038 = vcmp.lt.s32.totalorder %v1037, 0
          %v1039 = vsub.s32 0, %v1037
          %v1040 = vsel %vm1038, %v1039, %v1037
          %v1041 = vclz %v1040
          %v1042 = vsub.s32 %v1041, 2
          %vm1043 = vcmp.gt.s32.totalorder 0, %v1042
          %v1044 = vsel %vm1043, 0, %v1042
          %v1045 = vsub.s32 32, %v1044
          %v1046 = vshll.u32 %v1037, %v1044
          %v1047 = vshrl.u32 %v1029, %v1045
          %v1048 = vor.u32 %v1046, %v1047
          %v1049 = vsub.s32 4294967266, %v1044
          %v1050 = vadd.s32 %v1049, 127
          %v1051 = vshll.u32 %v1050, 23
          %v1052 = vor.u32 4788187, %v1051
          %v1053 = vand.u32 2147483647, %v1052
          %v1055 = vcvt.s32.f32 %v1048
          %v1056 = vmul.f32 %v1055, %v1053
          %v1057 = vxor.u32 %v1056, 2147483648
          %v1058 = vsel %vm937, %v1057, %v1056
          %v1059 = vsub.s32 4, %v1035
          %v1060 = vsel %vm937, %v1059, %v1035
          %v1061 = vsel %vm936, %v311, %v1058
          %v1062 = vsel %vm936, 0, %v1060
          %v1063 = vmul.f32 %v1061, %v1061
          %v1064 = vmul.f32 %v1063, -0.001358992
          %v1065 = vadd.f32 %v1064, 0.041655596
          %v1066 = vmul.f32 %v1063, %v1065
          %v1067 = vadd.f32 %v1066, -0.4999988
          %v1068 = vmul.f32 %v1063, %v1067
          %v1069 = vadd.f32 1.0, %v1068
          %v1070 = vmul.f32 %v1061, %v1061
          %v1071 = vmul.f32 %v1070, -0.00019511016
          %v1072 = vadd.f32 %v1071, 0.008332121
          %v1073 = vmul.f32 %v1070, %v1072
          %v1074 = vadd.f32 %v1073, -0.16666654
          %v1075 = vmul.f32 %v1070, %v1074
          %v1076 = vadd.f32 %v1075, 1.0
          %v1077 = vmul.f32 %v1076, %v1061
          %vm1078 = vweird.f32 %v311
          %v1079 = vand.u32 %v1062, 3
          %vm1080 = vcmp.lt.s32.totalorder %v1079, 2
          %vm1081 = vcmp.eq.s32.totalorder %v1079, 0
          %v1082 = vxor.u32 %v1077, 2147483648
          %v1083 = vsel %vm1081, %v1069, %v1082
          %vm1084 = vcmp.eq.s32.totalorder %v1079, 2
          %v1085 = vxor.u32 %v1069, 2147483648
          %v1086 = vsel %vm1084, %v1085, %v1077
          %v1087 = vsel %vm1080, %v1083, %v1086
          %v1088 = vsel %vm1078, nan, %v1087
          %v1089 = vand.u32 2147483647, %v312
          %vm1090 = vcmp.le.f32.partialorder %v1089, 0.7853982
          %vm1091 = vcmp.lt.s32.totalorder %v312, 0
          %v1092 = vand.u32 %v312, 2139095040
          %v1093 = vshrl.u32 %v1092, 23
          %v1094 = vsub.s32 %v1093, 127
          %v1095 = vand.u32 2147483647, %v312
          %v1096 = vand.u32 %v1095, 8388607
          %v1097 = vor.u32 %v1096, 8388608
          %v1098 = vsub.s32 0, %v1097
          %v1099 = vadd.s32 %v1094, 1
          %vm1100 = vcmp.gt.s32.totalorder %v1099, 0
          %v1101 = vsel %vm1100, %v1099, 0
          %v1102 = vshrl.u32 %v1101, 5
          %v1103 = vand.u32 %v1101, 31
          %v1104 = vsub.s32 32, %v1103
          %v1105 = vshrl.u32 683565275, %v1104
          %v1106 = vshll.u32 683565275, %v1103
          %v1107 = vshrl.u32 2475754826, %v1104
          %v1108 = vor.u32 %v1106, %v1107
          %v1109 = vshll.u32 2475754826, %v1103
          %v1110 = vshrl.u32 2131351028, %v1104
          %v1111 = vor.u32 %v1109, %v1110
          %v1112 = vshll.u32 2131351028, %v1103
          %v1113 = vshrl.u32 2102212464, %v1104
          %v1114 = vor.u32 %v1112, %v1113
          %v1115 = vshll.u32 2102212464, %v1103
          %v1116 = vshrl.u32 920167782, %v1104
          %v1117 = vor.u32 %v1115, %v1116
          %v1118 = vshll.u32 920167782, %v1103
          %v1119 = vshrl.u32 1326507024, %v1104
          %v1120 = vor.u32 %v1118, %v1119
          %vm1121 = vcmp.lt.s32.totalorder %v1102, 1
          %vm1122 = vcmp.lt.s32.totalorder %v1102, 2
          %vm1123 = vcmp.lt.s32.totalorder %v1102, 3
          %vm1124 = vcmp.lt.s32.totalorder %v1102, 4
          %v1125 = vsel %vm1121, %v1105, %v1108
          %v1126 = vsel %vm1124, %v1114, 2102212464
          %v1127 = vsel %vm1123, %v1111, %v1126
          %v1128 = vsel %vm1122, %v1125, %v1127
          %v1129 = vsel %vm1121, %v1108, %v1111
          %v1130 = vsel %vm1124, %v1117, 920167782
          %v1131 = vsel %vm1123, %v1114, %v1130
          %v1132 = vsel %vm1122, %v1129, %v1131
          %v1133 = vsel %vm1121, %v1111, %v1114
          %v1134 = vsel %vm1124, %v1120, 1326507024
          %v1135 = vsel %vm1123, %v1117, %v1134
          %v1136 = vsel %vm1122, %v1133, %v1135
          %v1137 = vshll.u32 %v1097, 8
          %v1138 = vand.u32 %v1137, 65535
          %v1139 = vshrl.u32 %v1137, 16
          %v1140 = vand.u32 %v1136, 65535
          %v1141 = vshrl.u32 %v1136, 16
          %v1142 = vmul.u32 %v1138, %v1140
          %v1143 = vmul.u32 %v1138, %v1141
          %v1144 = vmul.u32 %v1139, %v1140
          %v1145 = vmul.u32 %v1139, %v1141
          %v1146 = vshll.u32 %v1143, 16
          %v1147 = vshrl.u32 %v1143, 16
          %v1148 = vshll.u32 %v1144, 16
          %v1149 = vshrl.u32 %v1144, 16
          %vm1150 = vc.u32 %v1142, %v1146
          %v1151 = vsel %vm1150, 1, 0
          %v1152 = vadd.s32 %v1142, %v1146
          %v1153 = vadd.s32 %v1145, %v1151
          %vm1154 = vc.u32 %v1152, %v1148
          %v1155 = vsel %vm1154, 1, 0
          %v1156 = vadd.s32 %v1152, %v1148
          %v1157 = vadd.s32 %v1153, %v1155
          %v1158 = vadd.s32 %v1157, %v1147
          %v1159 = vadd.s32 %v1158, %v1149
          %v1160 = vand.u32 %v1137, 65535
          %v1161 = vshrl.u32 %v1137, 16
          %v1162 = vand.u32 %v1132, 65535
          %v1163 = vshrl.u32 %v1132, 16
          %v1164 = vmul.u32 %v1160, %v1162
          %v1165 = vmul.u32 %v1160, %v1163
          %v1166 = vmul.u32 %v1161, %v1162
          %v1167 = vmul.u32 %v1161, %v1163
          %v1168 = vshll.u32 %v1165, 16
          %v1169 = vshrl.u32 %v1165, 16
          %v1170 = vshll.u32 %v1166, 16
          %v1171 = vshrl.u32 %v1166, 16
          %vm1172 = vc.u32 %v1164, %v1168
          %v1173 = vsel %vm1172, 1, 0
          %v1174 = vadd.s32 %v1164, %v1168
          %v1175 = vadd.s32 %v1167, %v1173
          %vm1176 = vc.u32 %v1174, %v1170
          %v1177 = vsel %vm1176, 1, 0
          %v1178 = vadd.s32 %v1174, %v1170
          %v1179 = vadd.s32 %v1175, %v1177
          %v1180 = vadd.s32 %v1179, %v1169
          %v1181 = vadd.s32 %v1180, %v1171
          %v1182 = vmul.u32 %v1137, %v1128
          %v1183 = vadd.s32 %v1159, %v1178
          %vm1184 = vc.u32 %v1159, %v1178
          %v1185 = vadd.s32 %v1181, 1
          %v1186 = vsel %vm1184, %v1185, %v1181
          %v1187 = vadd.s32 %v1182, %v1186
          %v1188 = vadd.s32 %v1187, 536870912
          %v1189 = vshrl.u32 %v1188, 30
          %v1190 = vshll.u32 %v1189, 30
          %v1191 = vsub.s32 %v1187, %v1190
          %vm1192 = vcmp.lt.s32.totalorder %v1191, 0
          %v1193 = vsub.s32 0, %v1191
          %v1194 = vsel %vm1192, %v1193, %v1191
          %v1195 = vclz %v1194
          %v1196 = vsub.s32 %v1195, 2
          %vm1197 = vcmp.gt.s32.totalorder 0, %v1196
          %v1198 = vsel %vm1197, 0, %v1196
          %v1199 = vsub.s32 32, %v1198
          %v1200 = vshll.u32 %v1191, %v1198
          %v1201 = vshrl.u32 %v1183, %v1199
          %v1202 = vor.u32 %v1200, %v1201
          %v1203 = vsub.s32 4294967266, %v1198
          %v1204 = vadd.s32 %v1203, 127
          %v1205 = vshll.u32 %v1204, 23
          %v1206 = vor.u32 4788187, %v1205
          %v1207 = vand.u32 2147483647, %v1206
          %v1209 = vcvt.s32.f32 %v1202
          %v1210 = vmul.f32 %v1209, %v1207
          %v1211 = vxor.u32 %v1210, 2147483648
          %v1212 = vsel %vm1091, %v1211, %v1210
          %v1213 = vsub.s32 4, %v1189
          %v1214 = vsel %vm1091, %v1213, %v1189
          %v1215 = vsel %vm1090, %v312, %v1212
          %v1216 = vsel %vm1090, 0, %v1214
          %v1217 = vmul.f32 %v1215, %v1215
          %v1218 = vmul.f32 %v1217, -0.001358992
          %v1219 = vadd.f32 %v1218, 0.041655596
          %v1220 = vmul.f32 %v1217, %v1219
          %v1221 = vadd.f32 %v1220, -0.4999988
          %v1222 = vmul.f32 %v1217, %v1221
          %v1223 = vadd.f32 1.0, %v1222
          %v1224 = vmul.f32 %v1215, %v1215
          %v1225 = vmul.f32 %v1224, -0.00019511016
          %v1226 = vadd.f32 %v1225, 0.008332121
          %v1227 = vmul.f32 %v1224, %v1226
          %v1228 = vadd.f32 %v1227, -0.16666654
          %v1229 = vmul.f32 %v1224, %v1228
          %v1230 = vadd.f32 %v1229, 1.0
          %v1231 = vmul.f32 %v1230, %v1215
          %vm1232 = vweird.f32 %v312
          %v1233 = vand.u32 %v1216, 3
          %vm1234 = vcmp.lt.s32.totalorder %v1233, 2
          %vm1235 = vcmp.eq.s32.totalorder %v1233, 0
          %v1236 = vxor.u32 %v1231, 2147483648
          %v1237 = vsel %vm1235, %v1223, %v1236
          %vm1238 = vcmp.eq.s32.totalorder %v1233, 2
          %v1239 = vxor.u32 %v1223, 2147483648
          %v1240 = vsel %vm1238, %v1239, %v1231
          %v1241 = vsel %vm1234, %v1237, %v1240
          %v1242 = vsel %vm1232, nan, %v1241
          %v1243 = vand.u32 2147483647, %v313
          %vm1244 = vcmp.le.f32.partialorder %v1243, 0.7853982
          %vm1245 = vcmp.lt.s32.totalorder %v313, 0
          %v1246 = vand.u32 %v313, 2139095040
          %v1247 = vshrl.u32 %v1246, 23
          %v1248 = vsub.s32 %v1247, 127
          %v1249 = vand.u32 2147483647, %v313
          %v1250 = vand.u32 %v1249, 8388607
          %v1251 = vor.u32 %v1250, 8388608
          %v1252 = vsub.s32 0, %v1251
          %v1253 = vadd.s32 %v1248, 1
          %vm1254 = vcmp.gt.s32.totalorder %v1253, 0
          %v1255 = vsel %vm1254, %v1253, 0
          %v1256 = vshrl.u32 %v1255, 5
          %v1257 = vand.u32 %v1255, 31
          %v1258 = vsub.s32 32, %v1257
          %v1259 = vshrl.u32 683565275, %v1258
          %v1260 = vshll.u32 683565275, %v1257
          %v1261 = vshrl.u32 2475754826, %v1258
          %v1262 = vor.u32 %v1260, %v1261
          %v1263 = vshll.u32 2475754826, %v1257
          %v1264 = vshrl.u32 2131351028, %v1258
          %v1265 = vor.u32 %v1263, %v1264
          %v1266 = vshll.u32 2131351028, %v1257
          %v1267 = vshrl.u32 2102212464, %v1258
          %v1268 = vor.u32 %v1266, %v1267
          %v1269 = vshll.u32 2102212464, %v1257
          %v1270 = vshrl.u32 920167782, %v1258
          %v1271 = vor.u32 %v1269, %v1270
          %v1272 = vshll.u32 920167782, %v1257
          %v1273 = vshrl.u32 1326507024, %v1258
          %v1274 = vor.u32 %v1272, %v1273
          %vm1275 = vcmp.lt.s32.totalorder %v1256, 1
          %vm1276 = vcmp.lt.s32.totalorder %v1256, 2
          %vm1277 = vcmp.lt.s32.totalorder %v1256, 3
          %vm1278 = vcmp.lt.s32.totalorder %v1256, 4
          %v1279 = vsel %vm1275, %v1259, %v1262
          %v1280 = vsel %vm1278, %v1268, 2102212464
          %v1281 = vsel %vm1277, %v1265, %v1280
          %v1282 = vsel %vm1276, %v1279, %v1281
          %v1283 = vsel %vm1275, %v1262, %v1265
          %v1284 = vsel %vm1278, %v1271, 920167782
          %v1285 = vsel %vm1277, %v1268, %v1284
          %v1286 = vsel %vm1276, %v1283, %v1285
          %v1287 = vsel %vm1275, %v1265, %v1268
          %v1288 = vsel %vm1278, %v1274, 1326507024
          %v1289 = vsel %vm1277, %v1271, %v1288
          %v1290 = vsel %vm1276, %v1287, %v1289
          %v1291 = vshll.u32 %v1251, 8
          %v1292 = vand.u32 %v1291, 65535
          %v1293 = vshrl.u32 %v1291, 16
          %v1294 = vand.u32 %v1290, 65535
          %v1295 = vshrl.u32 %v1290, 16
          %v1296 = vmul.u32 %v1292, %v1294
          %v1297 = vmul.u32 %v1292, %v1295
          %v1298 = vmul.u32 %v1293, %v1294
          %v1299 = vmul.u32 %v1293, %v1295
          %v1300 = vshll.u32 %v1297, 16
          %v1301 = vshrl.u32 %v1297, 16
          %v1302 = vshll.u32 %v1298, 16
          %v1303 = vshrl.u32 %v1298, 16
          %vm1304 = vc.u32 %v1296, %v1300
          %v1305 = vsel %vm1304, 1, 0
          %v1306 = vadd.s32 %v1296, %v1300
          %v1307 = vadd.s32 %v1299, %v1305
          %vm1308 = vc.u32 %v1306, %v1302
          %v1309 = vsel %vm1308, 1, 0
          %v1310 = vadd.s32 %v1306, %v1302
          %v1311 = vadd.s32 %v1307, %v1309
          %v1312 = vadd.s32 %v1311, %v1301
          %v1313 = vadd.s32 %v1312, %v1303
          %v1314 = vand.u32 %v1291, 65535
          %v1315 = vshrl.u32 %v1291, 16
          %v1316 = vand.u32 %v1286, 65535
          %v1317 = vshrl.u32 %v1286, 16
          %v1318 = vmul.u32 %v1314, %v1316
          %v1319 = vmul.u32 %v1314, %v1317
          %v1320 = vmul.u32 %v1315, %v1316
          %v1321 = vmul.u32 %v1315, %v1317
          %v1322 = vshll.u32 %v1319, 16
          %v1323 = vshrl.u32 %v1319, 16
          %v1324 = vshll.u32 %v1320, 16
          %v1325 = vshrl.u32 %v1320, 16
          %vm1326 = vc.u32 %v1318, %v1322
          %v1327 = vsel %vm1326, 1, 0
          %v1328 = vadd.s32 %v1318, %v1322
          %v1329 = vadd.s32 %v1321, %v1327
          %vm1330 = vc.u32 %v1328, %v1324
          %v1331 = vsel %vm1330, 1, 0
          %v1332 = vadd.s32 %v1328, %v1324
          %v1333 = vadd.s32 %v1329, %v1331
          %v1334 = vadd.s32 %v1333, %v1323
          %v1335 = vadd.s32 %v1334, %v1325
          %v1336 = vmul.u32 %v1291, %v1282
          %v1337 = vadd.s32 %v1313, %v1332
          %vm1338 = vc.u32 %v1313, %v1332
          %v1339 = vadd.s32 %v1335, 1
          %v1340 = vsel %vm1338, %v1339, %v1335
          %v1341 = vadd.s32 %v1336, %v1340
          %v1342 = vadd.s32 %v1341, 536870912
          %v1343 = vshrl.u32 %v1342, 30
          %v1344 = vshll.u32 %v1343, 30
          %v1345 = vsub.s32 %v1341, %v1344
          %vm1346 = vcmp.lt.s32.totalorder %v1345, 0
          %v1347 = vsub.s32 0, %v1345
          %v1348 = vsel %vm1346, %v1347, %v1345
          %v1349 = vclz %v1348
          %v1350 = vsub.s32 %v1349, 2
          %vm1351 = vcmp.gt.s32.totalorder 0, %v1350
          %v1352 = vsel %vm1351, 0, %v1350
          %v1353 = vsub.s32 32, %v1352
          %v1354 = vshll.u32 %v1345, %v1352
          %v1355 = vshrl.u32 %v1337, %v1353
          %v1356 = vor.u32 %v1354, %v1355
          %v1357 = vsub.s32 4294967266, %v1352
          %v1358 = vadd.s32 %v1357, 127
          %v1359 = vshll.u32 %v1358, 23
          %v1360 = vor.u32 4788187, %v1359
          %v1361 = vand.u32 2147483647, %v1360
          %v1363 = vcvt.s32.f32 %v1356
          %v1364 = vmul.f32 %v1363, %v1361
          %v1365 = vxor.u32 %v1364, 2147483648
          %v1366 = vsel %vm1245, %v1365, %v1364
          %v1367 = vsub.s32 4, %v1343
          %v1368 = vsel %vm1245, %v1367, %v1343
          %v1369 = vsel %vm1244, %v313, %v1366
          %v1370 = vsel %vm1244, 0, %v1368
          %v1371 = vmul.f32 %v1369, %v1369
          %v1372 = vmul.f32 %v1371, -0.001358992
          %v1373 = vadd.f32 %v1372, 0.041655596
          %v1374 = vmul.f32 %v1371, %v1373
          %v1375 = vadd.f32 %v1374, -0.4999988
          %v1376 = vmul.f32 %v1371, %v1375
          %v1377 = vadd.f32 1.0, %v1376
          %v1378 = vmul.f32 %v1369, %v1369
          %v1379 = vmul.f32 %v1378, -0.00019511016
          %v1380 = vadd.f32 %v1379, 0.008332121
          %v1381 = vmul.f32 %v1378, %v1380
          %v1382 = vadd.f32 %v1381, -0.16666654
          %v1383 = vmul.f32 %v1378, %v1382
          %v1384 = vadd.f32 %v1383, 1.0
          %v1385 = vmul.f32 %v1384, %v1369
          %vm1386 = vweird.f32 %v313
          %v1387 = vand.u32 %v1370, 3
          %vm1388 = vcmp.lt.s32.totalorder %v1387, 2
          %vm1389 = vcmp.eq.s32.totalorder %v1387, 0
          %v1390 = vxor.u32 %v1385, 2147483648
          %v1391 = vsel %vm1389, %v1377, %v1390
          %vm1392 = vcmp.eq.s32.totalorder %v1387, 2
          %v1393 = vxor.u32 %v1377, 2147483648
          %v1394 = vsel %vm1392, %v1393, %v1385
          %v1395 = vsel %vm1388, %v1391, %v1394
          %v1396 = vsel %vm1386, nan, %v1395
          %v1397 = vand.u32 2147483647, %v314
          %vm1398 = vcmp.le.f32.partialorder %v1397, 0.7853982
          %vm1399 = vcmp.lt.s32.totalorder %v314, 0
          %v1400 = vand.u32 %v314, 2139095040
          %v1401 = vshrl.u32 %v1400, 23
          %v1402 = vsub.s32 %v1401, 127
          %v1403 = vand.u32 2147483647, %v314
          %v1404 = vand.u32 %v1403, 8388607
          %v1405 = vor.u32 %v1404, 8388608
          %v1406 = vsub.s32 0, %v1405
          %v1407 = vadd.s32 %v1402, 1
          %vm1408 = vcmp.gt.s32.totalorder %v1407, 0
          %v1409 = vsel %vm1408, %v1407, 0
          %v1410 = vshrl.u32 %v1409, 5
          %v1411 = vand.u32 %v1409, 31
          %v1412 = vsub.s32 32, %v1411
          %v1413 = vshrl.u32 683565275, %v1412
          %v1414 = vshll.u32 683565275, %v1411
          %v1415 = vshrl.u32 2475754826, %v1412
          %v1416 = vor.u32 %v1414, %v1415
          %v1417 = vshll.u32 2475754826, %v1411
          %v1418 = vshrl.u32 2131351028, %v1412
          %v1419 = vor.u32 %v1417, %v1418
          %v1420 = vshll.u32 2131351028, %v1411
          %v1421 = vshrl.u32 2102212464, %v1412
          %v1422 = vor.u32 %v1420, %v1421
          %v1423 = vshll.u32 2102212464, %v1411
          %v1424 = vshrl.u32 920167782, %v1412
          %v1425 = vor.u32 %v1423, %v1424
          %v1426 = vshll.u32 920167782, %v1411
          %v1427 = vshrl.u32 1326507024, %v1412
          %v1428 = vor.u32 %v1426, %v1427
          %vm1429 = vcmp.lt.s32.totalorder %v1410, 1
          %vm1430 = vcmp.lt.s32.totalorder %v1410, 2
          %vm1431 = vcmp.lt.s32.totalorder %v1410, 3
          %vm1432 = vcmp.lt.s32.totalorder %v1410, 4
          %v1433 = vsel %vm1429, %v1413, %v1416
          %v1434 = vsel %vm1432, %v1422, 2102212464
          %v1435 = vsel %vm1431, %v1419, %v1434
          %v1436 = vsel %vm1430, %v1433, %v1435
          %v1437 = vsel %vm1429, %v1416, %v1419
          %v1438 = vsel %vm1432, %v1425, 920167782
          %v1439 = vsel %vm1431, %v1422, %v1438
          %v1440 = vsel %vm1430, %v1437, %v1439
          %v1441 = vsel %vm1429, %v1419, %v1422
          %v1442 = vsel %vm1432, %v1428, 1326507024
          %v1443 = vsel %vm1431, %v1425, %v1442
          %v1444 = vsel %vm1430, %v1441, %v1443
          %v1445 = vshll.u32 %v1405, 8
          %v1446 = vand.u32 %v1445, 65535
          %v1447 = vshrl.u32 %v1445, 16
          %v1448 = vand.u32 %v1444, 65535
          %v1449 = vshrl.u32 %v1444, 16
          %v1450 = vmul.u32 %v1446, %v1448
          %v1451 = vmul.u32 %v1446, %v1449
          %v1452 = vmul.u32 %v1447, %v1448
          %v1453 = vmul.u32 %v1447, %v1449
          %v1454 = vshll.u32 %v1451, 16
          %v1455 = vshrl.u32 %v1451, 16
          %v1456 = vshll.u32 %v1452, 16
          %v1457 = vshrl.u32 %v1452, 16
          %vm1458 = vc.u32 %v1450, %v1454
          %v1459 = vsel %vm1458, 1, 0
          %v1460 = vadd.s32 %v1450, %v1454
          %v1461 = vadd.s32 %v1453, %v1459
          %vm1462 = vc.u32 %v1460, %v1456
          %v1463 = vsel %vm1462, 1, 0
          %v1464 = vadd.s32 %v1460, %v1456
          %v1465 = vadd.s32 %v1461, %v1463
          %v1466 = vadd.s32 %v1465, %v1455
          %v1467 = vadd.s32 %v1466, %v1457
          %v1468 = vand.u32 %v1445, 65535
          %v1469 = vshrl.u32 %v1445, 16
          %v1470 = vand.u32 %v1440, 65535
          %v1471 = vshrl.u32 %v1440, 16
          %v1472 = vmul.u32 %v1468, %v1470
          %v1473 = vmul.u32 %v1468, %v1471
          %v1474 = vmul.u32 %v1469, %v1470
          %v1475 = vmul.u32 %v1469, %v1471
          %v1476 = vshll.u32 %v1473, 16
          %v1477 = vshrl.u32 %v1473, 16
          %v1478 = vshll.u32 %v1474, 16
          %v1479 = vshrl.u32 %v1474, 16
          %vm1480 = vc.u32 %v1472, %v1476
          %v1481 = vsel %vm1480, 1, 0
          %v1482 = vadd.s32 %v1472, %v1476
          %v1483 = vadd.s32 %v1475, %v1481
          %vm1484 = vc.u32 %v1482, %v1478
          %v1485 = vsel %vm1484, 1, 0
          %v1486 = vadd.s32 %v1482, %v1478
          %v1487 = vadd.s32 %v1483, %v1485
          %v1488 = vadd.s32 %v1487, %v1477
          %v1489 = vadd.s32 %v1488, %v1479
          %v1490 = vmul.u32 %v1445, %v1436
          %v1491 = vadd.s32 %v1467, %v1486
          %vm1492 = vc.u32 %v1467, %v1486
          %v1493 = vadd.s32 %v1489, 1
          %v1494 = vsel %vm1492, %v1493, %v1489
          %v1495 = vadd.s32 %v1490, %v1494
          %v1496 = vadd.s32 %v1495, 536870912
          %v1497 = vshrl.u32 %v1496, 30
          %v1498 = vshll.u32 %v1497, 30
          %v1499 = vsub.s32 %v1495, %v1498
          %vm1500 = vcmp.lt.s32.totalorder %v1499, 0
          %v1501 = vsub.s32 0, %v1499
          %v1502 = vsel %vm1500, %v1501, %v1499
          %v1503 = vclz %v1502
          %v1504 = vsub.s32 %v1503, 2
          %vm1505 = vcmp.gt.s32.totalorder 0, %v1504
          %v1506 = vsel %vm1505, 0, %v1504
          %v1507 = vsub.s32 32, %v1506
          %v1508 = vshll.u32 %v1499, %v1506
          %v1509 = vshrl.u32 %v1491, %v1507
          %v1510 = vor.u32 %v1508, %v1509
          %v1511 = vsub.s32 4294967266, %v1506
          %v1512 = vadd.s32 %v1511, 127
          %v1513 = vshll.u32 %v1512, 23
          %v1514 = vor.u32 4788187, %v1513
          %v1515 = vand.u32 2147483647, %v1514
          %v1517 = vcvt.s32.f32 %v1510
          %v1518 = vmul.f32 %v1517, %v1515
          %v1519 = vxor.u32 %v1518, 2147483648
          %v1520 = vsel %vm1399, %v1519, %v1518
          %v1521 = vsub.s32 4, %v1497
          %v1522 = vsel %vm1399, %v1521, %v1497
          %v1523 = vsel %vm1398, %v314, %v1520
          %v1524 = vsel %vm1398, 0, %v1522
          %v1525 = vmul.f32 %v1523, %v1523
          %v1526 = vmul.f32 %v1525, -0.001358992
          %v1527 = vadd.f32 %v1526, 0.041655596
          %v1528 = vmul.f32 %v1525, %v1527
          %v1529 = vadd.f32 %v1528, -0.4999988
          %v1530 = vmul.f32 %v1525, %v1529
          %v1531 = vadd.f32 1.0, %v1530
          %v1532 = vmul.f32 %v1523, %v1523
          %v1533 = vmul.f32 %v1532, -0.00019511016
          %v1534 = vadd.f32 %v1533, 0.008332121
          %v1535 = vmul.f32 %v1532, %v1534
          %v1536 = vadd.f32 %v1535, -0.16666654
          %v1537 = vmul.f32 %v1532, %v1536
          %v1538 = vadd.f32 %v1537, 1.0
          %v1539 = vmul.f32 %v1538, %v1523
          %vm1540 = vweird.f32 %v314
          %v1541 = vand.u32 %v1524, 3
          %vm1542 = vcmp.lt.s32.totalorder %v1541, 2
          %vm1543 = vcmp.eq.s32.totalorder %v1541, 0
          %v1544 = vxor.u32 %v1539, 2147483648
          %v1545 = vsel %vm1543, %v1531, %v1544
          %vm1546 = vcmp.eq.s32.totalorder %v1541, 2
          %v1547 = vxor.u32 %v1531, 2147483648
          %v1548 = vsel %vm1546, %v1547, %v1539
          %v1549 = vsel %vm1542, %v1545, %v1548
          %v1550 = vsel %vm1540, nan, %v1549
          %v1551 = vmul.f32 %v1088, 2.0
          %v1552 = vmul.f32 %v1242, 2.0
          %v1553 = vmul.f32 %v1396, 2.0
          %v1554 = vmul.f32 %v1550, 2.0
          %s1555 = smul.addr %s307, 8
          %s1556 = scalar_lea.vmem %s288, %s1555
          %v1557 = vld [vmem:[%s1556] sm:$0xff]
          %v1558 = vld [vmem:[%s1556 + $0x8] sm:$0xff]
          %v1559 = vld [vmem:[%s1556 + $0x10] sm:$0xff]
          %v1560 = vld [vmem:[%s1556 + $0x18] sm:$0xff]
          %v1561 = vmul.f32 %v1557, 0.002915452
          %v1562 = vmul.f32 %v1558, 0.002915452
          %v1563 = vmul.f32 %v1559, 0.002915452
          %v1564 = vmul.f32 %v1560, 0.002915452
          %s1565 = sld [smem:[#allocation2 + $0x1]]
          %s1566 = sld [smem:[#allocation2]]
          %v1567 = vstv %s1565
          %v1568 = vmul.f32 %v1561, %v1567
          %v1569 = vmul.f32 %v1562, %v1567
          %v1570 = vmul.f32 %v1563, %v1567
          %v1571 = vmul.f32 %v1564, %v1567
          %v1572 = vstv %s1566
          %v1573 = vadd.f32 %v1572, %v1568
          %v1574 = vadd.f32 %v1572, %v1569
          %v1575 = vadd.f32 %v1572, %v1570
          %v1576 = vadd.f32 %v1572, %v1571
          %v1577 = vmul.f32 %v1561, %v1573
          %v1578 = vmul.f32 %v1562, %v1574
          %v1579 = vmul.f32 %v1563, %v1575
          %v1580 = vmul.f32 %v1564, %v1576
          %v1581 = vmul.f32 %v1577, 1.442695
          %v1582 = vpow.pop %v1581
          %v1583 = vmul.f32 %v1578, 1.442695
          %v1584 = vpow.pop %v1583
          %v1585 = vmul.f32 %v1579, 1.442695
          %v1586 = vpow.pop %v1585
          %v1587 = vmul.f32 %v1580, 1.442695
          %v1588 = vpow.pop %v1587
          %s1589 = sld [smem:[#allocation4]]
          %v1590 = vstv %s1589
          %v1591 = vmul.f32 %v1590, %v469
          %v1592 = vmul.f32 %v1590, %v624
          %v1593 = vmul.f32 %v1590, %v779
          %v1594 = vmul.f32 %v1590, %v934
          %v1595 = vmul.f32 %v1551, %v469
          %v1596 = vmul.f32 %v1552, %v624
          %v1597 = vmul.f32 %v1553, %v779
          %v1598 = vmul.f32 %v1554, %v934
          %s1599 = sld [smem:[#allocation4 + $0x1]]
          %v1600 = vstv %s1599
          %v1601 = vmul.f32 %v1600, %v1595
          %v1602 = vmul.f32 %v1600, %v1596
          %v1603 = vmul.f32 %v1600, %v1597
          %v1604 = vmul.f32 %v1600, %v1598
          %v1605 = vadd.f32 %v1591, %v1601
          %v1606 = vadd.f32 %v1592, %v1602
          %v1607 = vadd.f32 %v1593, %v1603
          %v1608 = vadd.f32 %v1594, %v1604
          %v1609 = vadd.f32 %v469, %v1595
          %v1610 = vadd.f32 %v624, %v1596
          %v1611 = vadd.f32 %v779, %v1597
          %v1612 = vadd.f32 %v934, %v1598
          %v1613 = vmul.f32 %v1551, %v1595
          %v1614 = vmul.f32 %v1552, %v1596
          %v1615 = vmul.f32 %v1553, %v1597
          %v1616 = vmul.f32 %v1554, %v1598
          %v1617 = vsub.f32 %v1613, %v469
          %v1618 = vsub.f32 %v1614, %v624
          %v1619 = vsub.f32 %v1615, %v779
          %v1620 = vsub.f32 %v1616, %v934
          %s1621 = sld [smem:[#allocation4 + $0x2]]
          %v1622 = vstv %s1621
          %v1623 = vmul.f32 %v1622, %v1617
          %v1624 = vmul.f32 %v1622, %v1618
          %v1625 = vmul.f32 %v1622, %v1619
          %v1626 = vmul.f32 %v1622, %v1620
          %v1627 = vadd.f32 %v1605, %v1623
          %v1628 = vadd.f32 %v1606, %v1624
          %v1629 = vadd.f32 %v1607, %v1625
          %v1630 = vadd.f32 %v1608, %v1626
          %v1631 = vadd.f32 %v1609, %v1617
          %v1632 = vadd.f32 %v1610, %v1618
          %v1633 = vadd.f32 %v1611, %v1619
          %v1634 = vadd.f32 %v1612, %v1620
          %v1635 = vmul.f32 %v1551, %v1617
          %v1636 = vmul.f32 %v1552, %v1618
          %v1637 = vmul.f32 %v1553, %v1619
          %v1638 = vmul.f32 %v1554, %v1620
          %v1639 = vsub.f32 %v1635, %v1595
          %v1640 = vsub.f32 %v1636, %v1596
          %v1641 = vsub.f32 %v1637, %v1597
          %v1642 = vsub.f32 %v1638, %v1598
          %s1643 = sld [smem:[#allocation4 + $0x3]]
          %v1644 = vstv %s1643
          %v1645 = vmul.f32 %v1644, %v1639
          %v1646 = vmul.f32 %v1644, %v1640
          %v1647 = vmul.f32 %v1644, %v1641
          %v1648 = vmul.f32 %v1644, %v1642
          %v1649 = vadd.f32 %v1627, %v1645
          %v1650 = vadd.f32 %v1628, %v1646
          %v1651 = vadd.f32 %v1629, %v1647
          %v1652 = vadd.f32 %v1630, %v1648
          %v1653 = vadd.f32 %v1631, %v1639
          %v1654 = vadd.f32 %v1632, %v1640
          %v1655 = vadd.f32 %v1633, %v1641
          %v1656 = vadd.f32 %v1634, %v1642
          %v1657 = vmul.f32 %v1551, %v1639
          %v1658 = vmul.f32 %v1552, %v1640
          %v1659 = vmul.f32 %v1553, %v1641
          %v1660 = vmul.f32 %v1554, %v1642
          %v1661 = vsub.f32 %v1657, %v1617
          %v1662 = vsub.f32 %v1658, %v1618
          %v1663 = vsub.f32 %v1659, %v1619
          %v1664 = vsub.f32 %v1660, %v1620
          %s1665 = sld [smem:[#allocation4 + $0x4]]
          %v1666 = vstv %s1665
          %v1667 = vmul.f32 %v1666, %v1661
          %v1668 = vmul.f32 %v1666, %v1662
          %v1669 = vmul.f32 %v1666, %v1663
          %v1670 = vmul.f32 %v1666, %v1664
          %v1671 = vadd.f32 %v1649, %v1667
          %v1672 = vadd.f32 %v1650, %v1668
          %v1673 = vadd.f32 %v1651, %v1669
          %v1674 = vadd.f32 %v1652, %v1670
          %v1675 = vadd.f32 %v1653, %v1661
          %v1676 = vadd.f32 %v1654, %v1662
          %v1677 = vadd.f32 %v1655, %v1663
          %v1678 = vadd.f32 %v1656, %v1664
          %v1679 = vmul.f32 %v1551, %v1661
          %v1680 = vmul.f32 %v1552, %v1662
          %v1681 = vmul.f32 %v1553, %v1663
          %v1682 = vmul.f32 %v1554, %v1664
          %v1683 = vsub.f32 %v1679, %v1639
          %v1684 = vsub.f32 %v1680, %v1640
          %v1685 = vsub.f32 %v1681, %v1641
          %v1686 = vsub.f32 %v1682, %v1642
          %s1687 = sld [smem:[#allocation4 + $0x5]]
          %v1688 = vstv %s1687
          %v1689 = vmul.f32 %v1688, %v1683
          %v1690 = vmul.f32 %v1688, %v1684
          %v1691 = vmul.f32 %v1688, %v1685
          %v1692 = vmul.f32 %v1688, %v1686
          %v1693 = vadd.f32 %v1671, %v1689
          %v1694 = vadd.f32 %v1672, %v1690
          %v1695 = vadd.f32 %v1673, %v1691
          %v1696 = vadd.f32 %v1674, %v1692
          %v1697 = vadd.f32 %v1675, %v1683
          %v1698 = vadd.f32 %v1676, %v1684
          %v1699 = vadd.f32 %v1677, %v1685
          %v1700 = vadd.f32 %v1678, %v1686
          %v1701 = vmul.f32 %v1551, %v1683
          %v1702 = vmul.f32 %v1552, %v1684
          %v1703 = vmul.f32 %v1553, %v1685
          %v1704 = vmul.f32 %v1554, %v1686
          %v1705 = vsub.f32 %v1701, %v1661
          %v1706 = vsub.f32 %v1702, %v1662
          %v1707 = vsub.f32 %v1703, %v1663
          %v1708 = vsub.f32 %v1704, %v1664
          %s1709 = sld [smem:[#allocation4 + $0x6]]
          %v1710 = vstv %s1709
          %v1711 = vmul.f32 %v1710, %v1705
          %v1712 = vmul.f32 %v1710, %v1706
          %v1713 = vmul.f32 %v1710, %v1707
          %v1714 = vmul.f32 %v1710, %v1708
          %v1715 = vadd.f32 %v1693, %v1711
          %v1716 = vadd.f32 %v1694, %v1712
          %v1717 = vadd.f32 %v1695, %v1713
          %v1718 = vadd.f32 %v1696, %v1714
          %v1719 = vadd.f32 %v1697, %v1705
          %v1720 = vadd.f32 %v1698, %v1706
          %v1721 = vadd.f32 %v1699, %v1707
          %v1722 = vadd.f32 %v1700, %v1708
          %v1723 = vmul.f32 %v1551, %v1705
          %v1724 = vmul.f32 %v1552, %v1706
          %v1725 = vmul.f32 %v1553, %v1707
          %v1726 = vmul.f32 %v1554, %v1708
          %v1727 = vsub.f32 %v1723, %v1683
          %v1728 = vsub.f32 %v1724, %v1684
          %v1729 = vsub.f32 %v1725, %v1685
          %v1730 = vsub.f32 %v1726, %v1686
          %s1731 = sld [smem:[#allocation4 + $0x7]]
          %v1732 = vstv %s1731
          %v1733 = vmul.f32 %v1732, %v1727
          %v1734 = vmul.f32 %v1732, %v1728
          %v1735 = vmul.f32 %v1732, %v1729
          %v1736 = vmul.f32 %v1732, %v1730
          %v1737 = vadd.f32 %v1715, %v1733
          %v1738 = vadd.f32 %v1716, %v1734
          %v1739 = vadd.f32 %v1717, %v1735
          %v1740 = vadd.f32 %v1718, %v1736
          %v1741 = vadd.f32 %v1719, %v1727
          %v1742 = vadd.f32 %v1720, %v1728
          %v1743 = vadd.f32 %v1721, %v1729
          %v1744 = vadd.f32 %v1722, %v1730
          %v1745 = vmul.f32 %v1551, %v1727
          %v1746 = vmul.f32 %v1552, %v1728
          %v1747 = vmul.f32 %v1553, %v1729
          %v1748 = vmul.f32 %v1554, %v1730
          %v1749 = vsub.f32 %v1745, %v1705
          %v1750 = vsub.f32 %v1746, %v1706
          %v1751 = vsub.f32 %v1747, %v1707
          %v1752 = vsub.f32 %v1748, %v1708
          %s1753 = sld [smem:[#allocation4 + $0x8]]
          %v1754 = vstv %s1753
          %v1755 = vmul.f32 %v1754, %v1749
          %v1756 = vmul.f32 %v1754, %v1750
          %v1757 = vmul.f32 %v1754, %v1751
          %v1758 = vmul.f32 %v1754, %v1752
          %v1759 = vadd.f32 %v1737, %v1755
          %v1760 = vadd.f32 %v1738, %v1756
          %v1761 = vadd.f32 %v1739, %v1757
          %v1762 = vadd.f32 %v1740, %v1758
          %v1763 = vadd.f32 %v1741, %v1749
          %v1764 = vadd.f32 %v1742, %v1750
          %v1765 = vadd.f32 %v1743, %v1751
          %v1766 = vadd.f32 %v1744, %v1752
          %v1767 = vmul.f32 %v1551, %v1749
          %v1768 = vmul.f32 %v1552, %v1750
          %v1769 = vmul.f32 %v1553, %v1751
          %v1770 = vmul.f32 %v1554, %v1752
          %v1771 = vsub.f32 %v1767, %v1727
          %v1772 = vsub.f32 %v1768, %v1728
          %v1773 = vsub.f32 %v1769, %v1729
          %v1774 = vsub.f32 %v1770, %v1730
          %s1775 = sld [smem:[#allocation4 + $0x9]]
          %v1776 = vstv %s1775
          %v1777 = vmul.f32 %v1776, %v1771
          %v1778 = vmul.f32 %v1776, %v1772
          %v1779 = vmul.f32 %v1776, %v1773
          %v1780 = vmul.f32 %v1776, %v1774
          %v1781 = vadd.f32 %v1759, %v1777
          %v1782 = vadd.f32 %v1760, %v1778
          %v1783 = vadd.f32 %v1761, %v1779
          %v1784 = vadd.f32 %v1762, %v1780
          %v1785 = vadd.f32 %v1763, %v1771
          %v1786 = vadd.f32 %v1764, %v1772
          %v1787 = vadd.f32 %v1765, %v1773
          %v1788 = vadd.f32 %v1766, %v1774
          %v1789 = vmul.f32 %v1551, %v1771
          %v1790 = vmul.f32 %v1552, %v1772
          %v1791 = vmul.f32 %v1553, %v1773
          %v1792 = vmul.f32 %v1554, %v1774
          %v1793 = vsub.f32 %v1789, %v1749
          %v1794 = vsub.f32 %v1790, %v1750
          %v1795 = vsub.f32 %v1791, %v1751
          %v1796 = vsub.f32 %v1792, %v1752
          %s1797 = sld [smem:[#allocation4 + $0xa]]
          %v1798 = vstv %s1797
          %v1799 = vmul.f32 %v1798, %v1793
          %v1800 = vmul.f32 %v1798, %v1794
          %v1801 = vmul.f32 %v1798, %v1795
          %v1802 = vmul.f32 %v1798, %v1796
          %v1803 = vadd.f32 %v1781, %v1799
          %v1804 = vadd.f32 %v1782, %v1800
          %v1805 = vadd.f32 %v1783, %v1801
          %v1806 = vadd.f32 %v1784, %v1802
          %v1807 = vadd.f32 %v1785, %v1793
          %v1808 = vadd.f32 %v1786, %v1794
          %v1809 = vadd.f32 %v1787, %v1795
          %v1810 = vadd.f32 %v1788, %v1796
          %v1811 = vmul.f32 %v1551, %v1793
          %v1812 = vmul.f32 %v1552, %v1794
          %v1813 = vmul.f32 %v1553, %v1795
          %v1814 = vmul.f32 %v1554, %v1796
          %v1815 = vsub.f32 %v1811, %v1771
          %v1816 = vsub.f32 %v1812, %v1772
          %v1817 = vsub.f32 %v1813, %v1773
          %v1818 = vsub.f32 %v1814, %v1774
          %s1819 = sld [smem:[#allocation4 + $0xb]]
          %v1820 = vstv %s1819
          %v1821 = vmul.f32 %v1820, %v1815
          %v1822 = vmul.f32 %v1820, %v1816
          %v1823 = vmul.f32 %v1820, %v1817
          %v1824 = vmul.f32 %v1820, %v1818
          %v1825 = vadd.f32 %v1803, %v1821
          %v1826 = vadd.f32 %v1804, %v1822
          %v1827 = vadd.f32 %v1805, %v1823
          %v1828 = vadd.f32 %v1806, %v1824
          %v1829 = vadd.f32 %v1807, %v1815
          %v1830 = vadd.f32 %v1808, %v1816
          %v1831 = vadd.f32 %v1809, %v1817
          %v1832 = vadd.f32 %v1810, %v1818
          %v1833 = vmul.f32 %v1551, %v1815
          %v1834 = vmul.f32 %v1552, %v1816
          %v1835 = vmul.f32 %v1553, %v1817
          %v1836 = vmul.f32 %v1554, %v1818
          %v1837 = vsub.f32 %v1833, %v1793
          %v1838 = vsub.f32 %v1834, %v1794
          %v1839 = vsub.f32 %v1835, %v1795
          %v1840 = vsub.f32 %v1836, %v1796
          %s1841 = sld [smem:[#allocation4 + $0xc]]
          %v1842 = vstv %s1841
          %v1843 = vmul.f32 %v1842, %v1837
          %v1844 = vmul.f32 %v1842, %v1838
          %v1845 = vmul.f32 %v1842, %v1839
          %v1846 = vmul.f32 %v1842, %v1840
          %v1847 = vadd.f32 %v1825, %v1843
          %v1848 = vadd.f32 %v1826, %v1844
          %v1849 = vadd.f32 %v1827, %v1845
          %v1850 = vadd.f32 %v1828, %v1846
          %v1851 = vadd.f32 %v1829, %v1837
          %v1852 = vadd.f32 %v1830, %v1838
          %v1853 = vadd.f32 %v1831, %v1839
          %v1854 = vadd.f32 %v1832, %v1840
          %v1855 = vmul.f32 %v1551, %v1837
          %v1856 = vmul.f32 %v1552, %v1838
          %v1857 = vmul.f32 %v1553, %v1839
          %v1858 = vmul.f32 %v1554, %v1840
          %v1859 = vsub.f32 %v1855, %v1815
          %v1860 = vsub.f32 %v1856, %v1816
          %v1861 = vsub.f32 %v1857, %v1817
          %v1862 = vsub.f32 %v1858, %v1818
          %s1863 = sld [smem:[#allocation4 + $0xd]]
          %v1864 = vstv %s1863
          %v1865 = vmul.f32 %v1864, %v1859
          %v1866 = vmul.f32 %v1864, %v1860
          %v1867 = vmul.f32 %v1864, %v1861
          %v1868 = vmul.f32 %v1864, %v1862
          %v1869 = vadd.f32 %v1847, %v1865
          %v1870 = vadd.f32 %v1848, %v1866
          %v1871 = vadd.f32 %v1849, %v1867
          %v1872 = vadd.f32 %v1850, %v1868
          %v1873 = vadd.f32 %v1851, %v1859
          %v1874 = vadd.f32 %v1852, %v1860
          %v1875 = vadd.f32 %v1853, %v1861
          %v1876 = vadd.f32 %v1854, %v1862
          %v1877 = vmul.f32 %v1551, %v1859
          %v1878 = vmul.f32 %v1552, %v1860
          %v1879 = vmul.f32 %v1553, %v1861
          %v1880 = vmul.f32 %v1554, %v1862
          %v1881 = vsub.f32 %v1877, %v1837
          %v1882 = vsub.f32 %v1878, %v1838
          %v1883 = vsub.f32 %v1879, %v1839
          %v1884 = vsub.f32 %v1880, %v1840
          %s1885 = sld [smem:[#allocation4 + $0xe]]
          %v1886 = vstv %s1885
          %v1887 = vmul.f32 %v1886, %v1881
          %v1888 = vmul.f32 %v1886, %v1882
          %v1889 = vmul.f32 %v1886, %v1883
          %v1890 = vmul.f32 %v1886, %v1884
          %v1891 = vadd.f32 %v1869, %v1887
          %v1892 = vadd.f32 %v1870, %v1888
          %v1893 = vadd.f32 %v1871, %v1889
          %v1894 = vadd.f32 %v1872, %v1890
          %v1895 = vadd.f32 %v1873, %v1881
          %v1896 = vadd.f32 %v1874, %v1882
          %v1897 = vadd.f32 %v1875, %v1883
          %v1898 = vadd.f32 %v1876, %v1884
          %v1899 = vmul.f32 %v1551, %v1881
          %v1900 = vmul.f32 %v1552, %v1882
          %v1901 = vmul.f32 %v1553, %v1883
          %v1902 = vmul.f32 %v1554, %v1884
          %v1903 = vsub.f32 %v1899, %v1859
          %v1904 = vsub.f32 %v1900, %v1860
          %v1905 = vsub.f32 %v1901, %v1861
          %v1906 = vsub.f32 %v1902, %v1862
          %s1907 = sld [smem:[#allocation4 + $0xf]]
          %v1908 = vstv %s1907
          %v1909 = vmul.f32 %v1908, %v1903
          %v1910 = vmul.f32 %v1908, %v1904
          %v1911 = vmul.f32 %v1908, %v1905
          %v1912 = vmul.f32 %v1908, %v1906
          %v1913 = vadd.f32 %v1891, %v1909
          %v1914 = vadd.f32 %v1892, %v1910
          %v1915 = vadd.f32 %v1893, %v1911
          %v1916 = vadd.f32 %v1894, %v1912
          %v1917 = vadd.f32 %v1895, %v1903
          %v1918 = vadd.f32 %v1896, %v1904
          %v1919 = vadd.f32 %v1897, %v1905
          %v1920 = vadd.f32 %v1898, %v1906
          %v1921 = vmul.f32 %v1551, %v1903
          %v1922 = vmul.f32 %v1552, %v1904
          %v1923 = vmul.f32 %v1553, %v1905
          %v1924 = vmul.f32 %v1554, %v1906
          %v1925 = vsub.f32 %v1921, %v1881
          %v1926 = vsub.f32 %v1922, %v1882
          %v1927 = vsub.f32 %v1923, %v1883
          %v1928 = vsub.f32 %v1924, %v1884
          %s1929 = sld [smem:[#allocation4 + $0x10]]
          %v1930 = vstv %s1929
          %v1931 = vmul.f32 %v1930, %v1925
          %v1932 = vmul.f32 %v1930, %v1926
          %v1933 = vmul.f32 %v1930, %v1927
          %v1934 = vmul.f32 %v1930, %v1928
          %v1935 = vadd.f32 %v1913, %v1931
          %v1936 = vadd.f32 %v1914, %v1932
          %v1937 = vadd.f32 %v1915, %v1933
          %v1938 = vadd.f32 %v1916, %v1934
          %v1939 = vadd.f32 %v1917, %v1925
          %v1940 = vadd.f32 %v1918, %v1926
          %v1941 = vadd.f32 %v1919, %v1927
          %v1942 = vadd.f32 %v1920, %v1928
          %v1943 = vmul.f32 %v1551, %v1925
          %v1944 = vmul.f32 %v1552, %v1926
          %v1945 = vmul.f32 %v1553, %v1927
          %v1946 = vmul.f32 %v1554, %v1928
          %v1947 = vsub.f32 %v1943, %v1903
          %v1948 = vsub.f32 %v1944, %v1904
          %v1949 = vsub.f32 %v1945, %v1905
          %v1950 = vsub.f32 %v1946, %v1906
          %s1951 = sld [smem:[#allocation4 + $0x11]]
          %v1952 = vstv %s1951
          %v1953 = vmul.f32 %v1952, %v1947
          %v1954 = vmul.f32 %v1952, %v1948
          %v1955 = vmul.f32 %v1952, %v1949
          %v1956 = vmul.f32 %v1952, %v1950
          %v1957 = vadd.f32 %v1935, %v1953
          %v1958 = vadd.f32 %v1936, %v1954
          %v1959 = vadd.f32 %v1937, %v1955
          %v1960 = vadd.f32 %v1938, %v1956
          %v1961 = vadd.f32 %v1939, %v1947
          %v1962 = vadd.f32 %v1940, %v1948
          %v1963 = vadd.f32 %v1941, %v1949
          %v1964 = vadd.f32 %v1942, %v1950
          %v1965 = vmul.f32 %v1551, %v1947
          %v1966 = vmul.f32 %v1552, %v1948
          %v1967 = vmul.f32 %v1553, %v1949
          %v1968 = vmul.f32 %v1554, %v1950
          %v1969 = vsub.f32 %v1965, %v1925
          %v1970 = vsub.f32 %v1966, %v1926
          %v1971 = vsub.f32 %v1967, %v1927
          %v1972 = vsub.f32 %v1968, %v1928
          %s1973 = sld [smem:[#allocation4 + $0x12]]
          %v1974 = vstv %s1973
          %v1975 = vmul.f32 %v1974, %v1969
          %v1976 = vmul.f32 %v1974, %v1970
          %v1977 = vmul.f32 %v1974, %v1971
          %v1978 = vmul.f32 %v1974, %v1972
          %v1979 = vadd.f32 %v1957, %v1975
          %v1980 = vadd.f32 %v1958, %v1976
          %v1981 = vadd.f32 %v1959, %v1977
          %v1982 = vadd.f32 %v1960, %v1978
          %v1983 = vadd.f32 %v1961, %v1969
          %v1984 = vadd.f32 %v1962, %v1970
          %v1985 = vadd.f32 %v1963, %v1971
          %v1986 = vadd.f32 %v1964, %v1972
          %v1987 = vmul.f32 %v1551, %v1969
          %v1988 = vmul.f32 %v1552, %v1970
          %v1989 = vmul.f32 %v1553, %v1971
          %v1990 = vmul.f32 %v1554, %v1972
          %v1991 = vsub.f32 %v1987, %v1947
          %v1992 = vsub.f32 %v1988, %v1948
          %v1993 = vsub.f32 %v1989, %v1949
          %v1994 = vsub.f32 %v1990, %v1950
          %s1995 = sld [smem:[#allocation4 + $0x13]]
          %v1996 = vstv %s1995
          %v1997 = vmul.f32 %v1996, %v1991
          %v1998 = vmul.f32 %v1996, %v1992
          %v1999 = vmul.f32 %v1996, %v1993
          %v2000 = vmul.f32 %v1996, %v1994
          %v2001 = vadd.f32 %v1979, %v1997
          %v2002 = vadd.f32 %v1980, %v1998
          %v2003 = vadd.f32 %v1981, %v1999
          %v2004 = vadd.f32 %v1982, %v2000
          %v2005 = vadd.f32 %v1983, %v1991
          %v2006 = vadd.f32 %v1984, %v1992
          %v2007 = vadd.f32 %v1985, %v1993
          %v2008 = vadd.f32 %v1986, %v1994
          %v2009 = vmul.f32 %v1551, %v1991
          %v2010 = vmul.f32 %v1552, %v1992
          %v2011 = vmul.f32 %v1553, %v1993
          %v2012 = vmul.f32 %v1554, %v1994
          %v2013 = vsub.f32 %v2009, %v1969
          %v2014 = vsub.f32 %v2010, %v1970
          %v2015 = vsub.f32 %v2011, %v1971
          %v2016 = vsub.f32 %v2012, %v1972
          %s2017 = sld [smem:[#allocation4 + $0x14]]
          %v2018 = vstv %s2017
          %v2019 = vmul.f32 %v2018, %v2013
          %v2020 = vmul.f32 %v2018, %v2014
          %v2021 = vmul.f32 %v2018, %v2015
          %v2022 = vmul.f32 %v2018, %v2016
          %v2023 = vadd.f32 %v2001, %v2019
          %v2024 = vadd.f32 %v2002, %v2020
          %v2025 = vadd.f32 %v2003, %v2021
          %v2026 = vadd.f32 %v2004, %v2022
          %v2027 = vadd.f32 %v2005, %v2013
          %v2028 = vadd.f32 %v2006, %v2014
          %v2029 = vadd.f32 %v2007, %v2015
          %v2030 = vadd.f32 %v2008, %v2016
          %v2031 = vmul.f32 %v1551, %v2013
          %v2032 = vmul.f32 %v1552, %v2014
          %v2033 = vmul.f32 %v1553, %v2015
          %v2034 = vmul.f32 %v1554, %v2016
          %v2035 = vsub.f32 %v2031, %v1991
          %v2036 = vsub.f32 %v2032, %v1992
          %v2037 = vsub.f32 %v2033, %v1993
          %v2038 = vsub.f32 %v2034, %v1994
          %s2039 = sld [smem:[#allocation4 + $0x15]]
          %v2040 = vstv %s2039
          %v2041 = vmul.f32 %v2040, %v2035
          %v2042 = vmul.f32 %v2040, %v2036
          %v2043 = vmul.f32 %v2040, %v2037
          %v2044 = vmul.f32 %v2040, %v2038
          %v2045 = vadd.f32 %v2023, %v2041
          %v2046 = vadd.f32 %v2024, %v2042
          %v2047 = vadd.f32 %v2025, %v2043
          %v2048 = vadd.f32 %v2026, %v2044
          %v2049 = vadd.f32 %v2027, %v2035
          %v2050 = vadd.f32 %v2028, %v2036
          %v2051 = vadd.f32 %v2029, %v2037
          %v2052 = vadd.f32 %v2030, %v2038
          %v2053 = vmul.f32 %v1551, %v2035
          %v2054 = vmul.f32 %v1552, %v2036
          %v2055 = vmul.f32 %v1553, %v2037
          %v2056 = vmul.f32 %v1554, %v2038
          %v2057 = vsub.f32 %v2053, %v2013
          %v2058 = vsub.f32 %v2054, %v2014
          %v2059 = vsub.f32 %v2055, %v2015
          %v2060 = vsub.f32 %v2056, %v2016
          %s2061 = sld [smem:[#allocation4 + $0x16]]
          %v2062 = vstv %s2061
          %v2063 = vmul.f32 %v2062, %v2057
          %v2064 = vmul.f32 %v2062, %v2058
          %v2065 = vmul.f32 %v2062, %v2059
          %v2066 = vmul.f32 %v2062, %v2060
          %v2067 = vadd.f32 %v2045, %v2063
          %v2068 = vadd.f32 %v2046, %v2064
          %v2069 = vadd.f32 %v2047, %v2065
          %v2070 = vadd.f32 %v2048, %v2066
          %v2071 = vadd.f32 %v2049, %v2057
          %v2072 = vadd.f32 %v2050, %v2058
          %v2073 = vadd.f32 %v2051, %v2059
          %v2074 = vadd.f32 %v2052, %v2060
          %v2075 = vmul.f32 %v1551, %v2057
          %v2076 = vmul.f32 %v1552, %v2058
          %v2077 = vmul.f32 %v1553, %v2059
          %v2078 = vmul.f32 %v1554, %v2060
          %v2079 = vsub.f32 %v2075, %v2035
          %v2080 = vsub.f32 %v2076, %v2036
          %v2081 = vsub.f32 %v2077, %v2037
          %v2082 = vsub.f32 %v2078, %v2038
          %s2083 = sld [smem:[#allocation4 + $0x17]]
          %v2084 = vstv %s2083
          %v2085 = vmul.f32 %v2084, %v2079
          %v2086 = vmul.f32 %v2084, %v2080
          %v2087 = vmul.f32 %v2084, %v2081
          %v2088 = vmul.f32 %v2084, %v2082
          %v2089 = vadd.f32 %v2067, %v2085
          %v2090 = vadd.f32 %v2068, %v2086
          %v2091 = vadd.f32 %v2069, %v2087
          %v2092 = vadd.f32 %v2070, %v2088
          %v2093 = vadd.f32 %v2071, %v2079
          %v2094 = vadd.f32 %v2072, %v2080
          %v2095 = vadd.f32 %v2073, %v2081
          %v2096 = vadd.f32 %v2074, %v2082
          %v2097 = vmul.f32 %v1551, %v2079
          %v2098 = vmul.f32 %v1552, %v2080
          %v2099 = vmul.f32 %v1553, %v2081
          %v2100 = vmul.f32 %v1554, %v2082
          %v2101 = vsub.f32 %v2097, %v2057
          %v2102 = vsub.f32 %v2098, %v2058
          %v2103 = vsub.f32 %v2099, %v2059
          %v2104 = vsub.f32 %v2100, %v2060
          %s2105 = sld [smem:[#allocation4 + $0x18]]
          %v2106 = vstv %s2105
          %v2107 = vmul.f32 %v2106, %v2101
          %v2108 = vmul.f32 %v2106, %v2102
          %v2109 = vmul.f32 %v2106, %v2103
          %v2110 = vmul.f32 %v2106, %v2104
          %v2111 = vadd.f32 %v2089, %v2107
          %v2112 = vadd.f32 %v2090, %v2108
          %v2113 = vadd.f32 %v2091, %v2109
          %v2114 = vadd.f32 %v2092, %v2110
          %v2115 = vadd.f32 %v2093, %v2101
          %v2116 = vadd.f32 %v2094, %v2102
          %v2117 = vadd.f32 %v2095, %v2103
          %v2118 = vadd.f32 %v2096, %v2104
          %v2119 = vmul.f32 %v1551, %v2101
          %v2120 = vmul.f32 %v1552, %v2102
          %v2121 = vmul.f32 %v1553, %v2103
          %v2122 = vmul.f32 %v1554, %v2104
          %v2123 = vsub.f32 %v2119, %v2079
          %v2124 = vsub.f32 %v2120, %v2080
          %v2125 = vsub.f32 %v2121, %v2081
          %v2126 = vsub.f32 %v2122, %v2082
          %s2127 = sld [smem:[#allocation4 + $0x19]]
          %v2128 = vstv %s2127
          %v2129 = vmul.f32 %v2128, %v2123
          %v2130 = vmul.f32 %v2128, %v2124
          %v2131 = vmul.f32 %v2128, %v2125
          %v2132 = vmul.f32 %v2128, %v2126
          %v2133 = vadd.f32 %v2111, %v2129
          %v2134 = vadd.f32 %v2112, %v2130
          %v2135 = vadd.f32 %v2113, %v2131
          %v2136 = vadd.f32 %v2114, %v2132
          %v2137 = vadd.f32 %v2115, %v2123
          %v2138 = vadd.f32 %v2116, %v2124
          %v2139 = vadd.f32 %v2117, %v2125
          %v2140 = vadd.f32 %v2118, %v2126
          %v2141 = vmul.f32 %v1551, %v2123
          %v2142 = vmul.f32 %v1552, %v2124
          %v2143 = vmul.f32 %v1553, %v2125
          %v2144 = vmul.f32 %v1554, %v2126
          %v2145 = vsub.f32 %v2141, %v2101
          %v2146 = vsub.f32 %v2142, %v2102
          %v2147 = vsub.f32 %v2143, %v2103
          %v2148 = vsub.f32 %v2144, %v2104
          %s2149 = sld [smem:[#allocation4 + $0x1a]]
          %v2150 = vstv %s2149
          %v2151 = vmul.f32 %v2150, %v2145
          %v2152 = vmul.f32 %v2150, %v2146
          %v2153 = vmul.f32 %v2150, %v2147
          %v2154 = vmul.f32 %v2150, %v2148
          %v2155 = vadd.f32 %v2133, %v2151
          %v2156 = vadd.f32 %v2134, %v2152
          %v2157 = vadd.f32 %v2135, %v2153
          %v2158 = vadd.f32 %v2136, %v2154
          %v2159 = vadd.f32 %v2137, %v2145
          %v2160 = vadd.f32 %v2138, %v2146
          %v2161 = vadd.f32 %v2139, %v2147
          %v2162 = vadd.f32 %v2140, %v2148
          %v2163 = vmul.f32 %v1551, %v2145
          %v2164 = vmul.f32 %v1552, %v2146
          %v2165 = vmul.f32 %v1553, %v2147
          %v2166 = vmul.f32 %v1554, %v2148
          %v2167 = vsub.f32 %v2163, %v2123
          %v2168 = vsub.f32 %v2164, %v2124
          %v2169 = vsub.f32 %v2165, %v2125
          %v2170 = vsub.f32 %v2166, %v2126
          %s2171 = sld [smem:[#allocation4 + $0x1b]]
          %v2172 = vstv %s2171
          %v2173 = vmul.f32 %v2172, %v2167
          %v2174 = vmul.f32 %v2172, %v2168
          %v2175 = vmul.f32 %v2172, %v2169
          %v2176 = vmul.f32 %v2172, %v2170
          %v2177 = vadd.f32 %v2155, %v2173
          %v2178 = vadd.f32 %v2156, %v2174
          %v2179 = vadd.f32 %v2157, %v2175
          %v2180 = vadd.f32 %v2158, %v2176
          %v2181 = vadd.f32 %v2159, %v2167
          %v2182 = vadd.f32 %v2160, %v2168
          %v2183 = vadd.f32 %v2161, %v2169
          %v2184 = vadd.f32 %v2162, %v2170
          %v2185 = vmul.f32 %v1551, %v2167
          %v2186 = vmul.f32 %v1552, %v2168
          %v2187 = vmul.f32 %v1553, %v2169
          %v2188 = vmul.f32 %v1554, %v2170
          %v2189 = vsub.f32 %v2185, %v2145
          %v2190 = vsub.f32 %v2186, %v2146
          %v2191 = vsub.f32 %v2187, %v2147
          %v2192 = vsub.f32 %v2188, %v2148
          %s2193 = sld [smem:[#allocation4 + $0x1c]]
          %v2194 = vstv %s2193
          %v2195 = vmul.f32 %v2194, %v2189
          %v2196 = vmul.f32 %v2194, %v2190
          %v2197 = vmul.f32 %v2194, %v2191
          %v2198 = vmul.f32 %v2194, %v2192
          %v2199 = vadd.f32 %v2177, %v2195
          %v2200 = vadd.f32 %v2178, %v2196
          %v2201 = vadd.f32 %v2179, %v2197
          %v2202 = vadd.f32 %v2180, %v2198
          %v2203 = vadd.f32 %v2181, %v2189
          %v2204 = vadd.f32 %v2182, %v2190
          %v2205 = vadd.f32 %v2183, %v2191
          %v2206 = vadd.f32 %v2184, %v2192
          %v2207 = vmul.f32 %v1551, %v2189
          %v2208 = vmul.f32 %v1552, %v2190
          %v2209 = vmul.f32 %v1553, %v2191
          %v2210 = vmul.f32 %v1554, %v2192
          %v2211 = vsub.f32 %v2207, %v2167
          %v2212 = vsub.f32 %v2208, %v2168
          %v2213 = vsub.f32 %v2209, %v2169
          %v2214 = vsub.f32 %v2210, %v2170
          %s2215 = sld [smem:[#allocation4 + $0x1d]]
          %v2216 = vstv %s2215
          %v2217 = vmul.f32 %v2216, %v2211
          %v2218 = vmul.f32 %v2216, %v2212
          %v2219 = vmul.f32 %v2216, %v2213
          %v2220 = vmul.f32 %v2216, %v2214
          %v2221 = vadd.f32 %v2199, %v2217
          %v2222 = vadd.f32 %v2200, %v2218
          %v2223 = vadd.f32 %v2201, %v2219
          %v2224 = vadd.f32 %v2202, %v2220
          %v2225 = vadd.f32 %v2203, %v2211
          %v2226 = vadd.f32 %v2204, %v2212
          %v2227 = vadd.f32 %v2205, %v2213
          %v2228 = vadd.f32 %v2206, %v2214
          %v2229 = vmul.f32 %v1551, %v2211
          %v2230 = vmul.f32 %v1552, %v2212
          %v2231 = vmul.f32 %v1553, %v2213
          %v2232 = vmul.f32 %v1554, %v2214
          %v2233 = vsub.f32 %v2229, %v2189
          %v2234 = vsub.f32 %v2230, %v2190
          %v2235 = vsub.f32 %v2231, %v2191
          %v2236 = vsub.f32 %v2232, %v2192
          %s2237 = sld [smem:[#allocation4 + $0x1e]]
          %v2238 = vstv %s2237
          %v2239 = vmul.f32 %v2238, %v2233
          %v2240 = vmul.f32 %v2238, %v2234
          %v2241 = vmul.f32 %v2238, %v2235
          %v2242 = vmul.f32 %v2238, %v2236
          %v2243 = vadd.f32 %v2221, %v2239
          %v2244 = vadd.f32 %v2222, %v2240
          %v2245 = vadd.f32 %v2223, %v2241
          %v2246 = vadd.f32 %v2224, %v2242
          %v2247 = vadd.f32 %v2225, %v2233
          %v2248 = vadd.f32 %v2226, %v2234
          %v2249 = vadd.f32 %v2227, %v2235
          %v2250 = vadd.f32 %v2228, %v2236
          %v2251 = vmul.f32 %v1551, %v2233
          %v2252 = vmul.f32 %v1552, %v2234
          %v2253 = vmul.f32 %v1553, %v2235
          %v2254 = vmul.f32 %v1554, %v2236
          %v2255 = vsub.f32 %v2251, %v2211
          %v2256 = vsub.f32 %v2252, %v2212
          %v2257 = vsub.f32 %v2253, %v2213
          %v2258 = vsub.f32 %v2254, %v2214
          %s2259 = sld [smem:[#allocation4 + $0x1f]]
          %v2260 = vstv %s2259
          %v2261 = vmul.f32 %v2260, %v2255
          %v2262 = vmul.f32 %v2260, %v2256
          %v2263 = vmul.f32 %v2260, %v2257
          %v2264 = vmul.f32 %v2260, %v2258
          %v2265 = vadd.f32 %v2243, %v2261
          %v2266 = vadd.f32 %v2244, %v2262
          %v2267 = vadd.f32 %v2245, %v2263
          %v2268 = vadd.f32 %v2246, %v2264
          %v2269 = vadd.f32 %v2247, %v2255
          %v2270 = vadd.f32 %v2248, %v2256
          %v2271 = vadd.f32 %v2249, %v2257
          %v2272 = vadd.f32 %v2250, %v2258
          %v2273 = vmul.f32 %v1551, %v2255
          %v2274 = vmul.f32 %v1552, %v2256
          %v2275 = vmul.f32 %v1553, %v2257
          %v2276 = vmul.f32 %v1554, %v2258
          %v2277 = vsub.f32 %v2273, %v2233
          %v2278 = vsub.f32 %v2274, %v2234
          %v2279 = vsub.f32 %v2275, %v2235
          %v2280 = vsub.f32 %v2276, %v2236
          %s2281 = sld [smem:[#allocation4 + $0x20]]
          %v2282 = vstv %s2281
          %v2283 = vmul.f32 %v2282, %v2277
          %v2284 = vmul.f32 %v2282, %v2278
          %v2285 = vmul.f32 %v2282, %v2279
          %v2286 = vmul.f32 %v2282, %v2280
          %v2287 = vadd.f32 %v2265, %v2283
          %v2288 = vadd.f32 %v2266, %v2284
          %v2289 = vadd.f32 %v2267, %v2285
          %v2290 = vadd.f32 %v2268, %v2286
          %v2291 = vadd.f32 %v2269, %v2277
          %v2292 = vadd.f32 %v2270, %v2278
          %v2293 = vadd.f32 %v2271, %v2279
          %v2294 = vadd.f32 %v2272, %v2280
          %v2295 = vmul.f32 %v1551, %v2277
          %v2296 = vmul.f32 %v1552, %v2278
          %v2297 = vmul.f32 %v1553, %v2279
          %v2298 = vmul.f32 %v1554, %v2280
          %v2299 = vsub.f32 %v2295, %v2255
          %v2300 = vsub.f32 %v2296, %v2256
          %v2301 = vsub.f32 %v2297, %v2257
          %v2302 = vsub.f32 %v2298, %v2258
          %s2303 = sld [smem:[#allocation4 + $0x21]]
          %v2304 = vstv %s2303
          %v2305 = vmul.f32 %v2304, %v2299
          %v2306 = vmul.f32 %v2304, %v2300
          %v2307 = vmul.f32 %v2304, %v2301
          %v2308 = vmul.f32 %v2304, %v2302
          %v2309 = vadd.f32 %v2287, %v2305
          %v2310 = vadd.f32 %v2288, %v2306
          %v2311 = vadd.f32 %v2289, %v2307
          %v2312 = vadd.f32 %v2290, %v2308
          %v2313 = vadd.f32 %v2291, %v2299
          %v2314 = vadd.f32 %v2292, %v2300
          %v2315 = vadd.f32 %v2293, %v2301
          %v2316 = vadd.f32 %v2294, %v2302
          %v2317 = vmul.f32 %v1551, %v2299
          %v2318 = vmul.f32 %v1552, %v2300
          %v2319 = vmul.f32 %v1553, %v2301
          %v2320 = vmul.f32 %v1554, %v2302
          %v2321 = vsub.f32 %v2317, %v2277
          %v2322 = vsub.f32 %v2318, %v2278
          %v2323 = vsub.f32 %v2319, %v2279
          %v2324 = vsub.f32 %v2320, %v2280
          %s2325 = sld [smem:[#allocation4 + $0x22]]
          %v2326 = vstv %s2325
          %v2327 = vmul.f32 %v2326, %v2321
          %v2328 = vmul.f32 %v2326, %v2322
          %v2329 = vmul.f32 %v2326, %v2323
          %v2330 = vmul.f32 %v2326, %v2324
          %v2331 = vadd.f32 %v2309, %v2327
          %v2332 = vadd.f32 %v2310, %v2328
          %v2333 = vadd.f32 %v2311, %v2329
          %v2334 = vadd.f32 %v2312, %v2330
          %v2335 = vadd.f32 %v2313, %v2321
          %v2336 = vadd.f32 %v2314, %v2322
          %v2337 = vadd.f32 %v2315, %v2323
          %v2338 = vadd.f32 %v2316, %v2324
          %v2339 = vmul.f32 %v1551, %v2321
          %v2340 = vmul.f32 %v1552, %v2322
          %v2341 = vmul.f32 %v1553, %v2323
          %v2342 = vmul.f32 %v1554, %v2324
          %v2343 = vsub.f32 %v2339, %v2299
          %v2344 = vsub.f32 %v2340, %v2300
          %v2345 = vsub.f32 %v2341, %v2301
          %v2346 = vsub.f32 %v2342, %v2302
          %s2347 = sld [smem:[#allocation4 + $0x23]]
          %v2348 = vstv %s2347
          %v2349 = vmul.f32 %v2348, %v2343
          %v2350 = vmul.f32 %v2348, %v2344
          %v2351 = vmul.f32 %v2348, %v2345
          %v2352 = vmul.f32 %v2348, %v2346
          %v2353 = vadd.f32 %v2331, %v2349
          %v2354 = vadd.f32 %v2332, %v2350
          %v2355 = vadd.f32 %v2333, %v2351
          %v2356 = vadd.f32 %v2334, %v2352
          %v2357 = vadd.f32 %v2335, %v2343
          %v2358 = vadd.f32 %v2336, %v2344
          %v2359 = vadd.f32 %v2337, %v2345
          %v2360 = vadd.f32 %v2338, %v2346
          %v2361 = vmul.f32 %v1551, %v2343
          %v2362 = vmul.f32 %v1552, %v2344
          %v2363 = vmul.f32 %v1553, %v2345
          %v2364 = vmul.f32 %v1554, %v2346
          %v2365 = vsub.f32 %v2361, %v2321
          %v2366 = vsub.f32 %v2362, %v2322
          %v2367 = vsub.f32 %v2363, %v2323
          %v2368 = vsub.f32 %v2364, %v2324
          %s2369 = sld [smem:[#allocation4 + $0x24]]
          %v2370 = vstv %s2369
          %v2371 = vmul.f32 %v2370, %v2365
          %v2372 = vmul.f32 %v2370, %v2366
          %v2373 = vmul.f32 %v2370, %v2367
          %v2374 = vmul.f32 %v2370, %v2368
          %v2375 = vadd.f32 %v2353, %v2371
          %v2376 = vadd.f32 %v2354, %v2372
          %v2377 = vadd.f32 %v2355, %v2373
          %v2378 = vadd.f32 %v2356, %v2374
          %v2379 = vadd.f32 %v2357, %v2365
          %v2380 = vadd.f32 %v2358, %v2366
          %v2381 = vadd.f32 %v2359, %v2367
          %v2382 = vadd.f32 %v2360, %v2368
          %v2383 = vmul.f32 %v1551, %v2365
          %v2384 = vmul.f32 %v1552, %v2366
          %v2385 = vmul.f32 %v1553, %v2367
          %v2386 = vmul.f32 %v1554, %v2368
          %v2387 = vsub.f32 %v2383, %v2343
          %v2388 = vsub.f32 %v2384, %v2344
          %v2389 = vsub.f32 %v2385, %v2345
          %v2390 = vsub.f32 %v2386, %v2346
          %s2391 = sld [smem:[#allocation4 + $0x25]]
          %v2392 = vstv %s2391
          %v2393 = vmul.f32 %v2392, %v2387
          %v2394 = vmul.f32 %v2392, %v2388
          %v2395 = vmul.f32 %v2392, %v2389
          %v2396 = vmul.f32 %v2392, %v2390
          %v2397 = vadd.f32 %v2375, %v2393
          %v2398 = vadd.f32 %v2376, %v2394
          %v2399 = vadd.f32 %v2377, %v2395
          %v2400 = vadd.f32 %v2378, %v2396
          %v2401 = vadd.f32 %v2379, %v2387
          %v2402 = vadd.f32 %v2380, %v2388
          %v2403 = vadd.f32 %v2381, %v2389
          %v2404 = vadd.f32 %v2382, %v2390
          %v2405 = vmul.f32 %v1551, %v2387
          %v2406 = vmul.f32 %v1552, %v2388
          %v2407 = vmul.f32 %v1553, %v2389
          %v2408 = vmul.f32 %v1554, %v2390
          %v2409 = vsub.f32 %v2405, %v2365
          %v2410 = vsub.f32 %v2406, %v2366
          %v2411 = vsub.f32 %v2407, %v2367
          %v2412 = vsub.f32 %v2408, %v2368
          %s2413 = sld [smem:[#allocation4 + $0x26]]
          %v2414 = vstv %s2413
          %v2415 = vmul.f32 %v2414, %v2409
          %v2416 = vmul.f32 %v2414, %v2410
          %v2417 = vmul.f32 %v2414, %v2411
          %v2418 = vmul.f32 %v2414, %v2412
          %v2419 = vadd.f32 %v2397, %v2415
          %v2420 = vadd.f32 %v2398, %v2416
          %v2421 = vadd.f32 %v2399, %v2417
          %v2422 = vadd.f32 %v2400, %v2418
          %v2423 = vadd.f32 %v2401, %v2409
          %v2424 = vadd.f32 %v2402, %v2410
          %v2425 = vadd.f32 %v2403, %v2411
          %v2426 = vadd.f32 %v2404, %v2412
          %v2427 = vmul.f32 %v1551, %v2409
          %v2428 = vmul.f32 %v1552, %v2410
          %v2429 = vmul.f32 %v1553, %v2411
          %v2430 = vmul.f32 %v1554, %v2412
          %v2431 = vsub.f32 %v2427, %v2387
          %v2432 = vsub.f32 %v2428, %v2388
          %v2433 = vsub.f32 %v2429, %v2389
          %v2434 = vsub.f32 %v2430, %v2390
          %s2435 = sld [smem:[#allocation4 + $0x27]]
          %v2436 = vstv %s2435
          %v2437 = vmul.f32 %v2436, %v2431
          %v2438 = vmul.f32 %v2436, %v2432
          %v2439 = vmul.f32 %v2436, %v2433
          %v2440 = vmul.f32 %v2436, %v2434
          %v2441 = vadd.f32 %v2419, %v2437
          %v2442 = vadd.f32 %v2420, %v2438
          %v2443 = vadd.f32 %v2421, %v2439
          %v2444 = vadd.f32 %v2422, %v2440
          %v2445 = vadd.f32 %v2423, %v2431
          %v2446 = vadd.f32 %v2424, %v2432
          %v2447 = vadd.f32 %v2425, %v2433
          %v2448 = vadd.f32 %v2426, %v2434
          %v2449 = vmul.f32 %v1551, %v2431
          %v2450 = vmul.f32 %v1552, %v2432
          %v2451 = vmul.f32 %v1553, %v2433
          %v2452 = vmul.f32 %v1554, %v2434
          %v2453 = vsub.f32 %v2449, %v2409
          %v2454 = vsub.f32 %v2450, %v2410
          %v2455 = vsub.f32 %v2451, %v2411
          %v2456 = vsub.f32 %v2452, %v2412
          %s2457 = sld [smem:[#allocation4 + $0x28]]
          %v2458 = vstv %s2457
          %v2459 = vmul.f32 %v2458, %v2453
          %v2460 = vmul.f32 %v2458, %v2454
          %v2461 = vmul.f32 %v2458, %v2455
          %v2462 = vmul.f32 %v2458, %v2456
          %v2463 = vadd.f32 %v2441, %v2459
          %v2464 = vadd.f32 %v2442, %v2460
          %v2465 = vadd.f32 %v2443, %v2461
          %v2466 = vadd.f32 %v2444, %v2462
          %v2467 = vadd.f32 %v2445, %v2453
          %v2468 = vadd.f32 %v2446, %v2454
          %v2469 = vadd.f32 %v2447, %v2455
          %v2470 = vadd.f32 %v2448, %v2456
          %v2471 = vmul.f32 %v1551, %v2453
          %v2472 = vmul.f32 %v1552, %v2454
          %v2473 = vmul.f32 %v1553, %v2455
          %v2474 = vmul.f32 %v1554, %v2456
          %v2475 = vsub.f32 %v2471, %v2431
          %v2476 = vsub.f32 %v2472, %v2432
          %v2477 = vsub.f32 %v2473, %v2433
          %v2478 = vsub.f32 %v2474, %v2434
          %s2479 = sld [smem:[#allocation4 + $0x29]]
          %v2480 = vstv %s2479
          %v2481 = vmul.f32 %v2480, %v2475
          %v2482 = vmul.f32 %v2480, %v2476
          %v2483 = vmul.f32 %v2480, %v2477
          %v2484 = vmul.f32 %v2480, %v2478
          %v2485 = vadd.f32 %v2463, %v2481
          %v2486 = vadd.f32 %v2464, %v2482
          %v2487 = vadd.f32 %v2465, %v2483
          %v2488 = vadd.f32 %v2466, %v2484
          %v2489 = vadd.f32 %v2467, %v2475
          %v2490 = vadd.f32 %v2468, %v2476
          %v2491 = vadd.f32 %v2469, %v2477
          %v2492 = vadd.f32 %v2470, %v2478
          %v2493 = vmul.f32 %v1551, %v2475
          %v2494 = vmul.f32 %v1552, %v2476
          %v2495 = vmul.f32 %v1553, %v2477
          %v2496 = vmul.f32 %v1554, %v2478
          %v2497 = vsub.f32 %v2493, %v2453
          %v2498 = vsub.f32 %v2494, %v2454
          %v2499 = vsub.f32 %v2495, %v2455
          %v2500 = vsub.f32 %v2496, %v2456
          %s2501 = sld [smem:[#allocation4 + $0x2a]]
          %v2502 = vstv %s2501
          %v2503 = vmul.f32 %v2502, %v2497
          %v2504 = vmul.f32 %v2502, %v2498
          %v2505 = vmul.f32 %v2502, %v2499
          %v2506 = vmul.f32 %v2502, %v2500
          %v2507 = vadd.f32 %v2485, %v2503
          %v2508 = vadd.f32 %v2486, %v2504
          %v2509 = vadd.f32 %v2487, %v2505
          %v2510 = vadd.f32 %v2488, %v2506
          %v2511 = vadd.f32 %v2489, %v2497
          %v2512 = vadd.f32 %v2490, %v2498
          %v2513 = vadd.f32 %v2491, %v2499
          %v2514 = vadd.f32 %v2492, %v2500
          %v2515 = vmul.f32 %v1551, %v2497
          %v2516 = vmul.f32 %v1552, %v2498
          %v2517 = vmul.f32 %v1553, %v2499
          %v2518 = vmul.f32 %v1554, %v2500
          %v2519 = vsub.f32 %v2515, %v2475
          %v2520 = vsub.f32 %v2516, %v2476
          %v2521 = vsub.f32 %v2517, %v2477
          %v2522 = vsub.f32 %v2518, %v2478
          %s2523 = sld [smem:[#allocation4 + $0x2b]]
          %v2524 = vstv %s2523
          %v2525 = vmul.f32 %v2524, %v2519
          %v2526 = vmul.f32 %v2524, %v2520
          %v2527 = vmul.f32 %v2524, %v2521
          %v2528 = vmul.f32 %v2524, %v2522
          %v2529 = vadd.f32 %v2507, %v2525
          %v2530 = vadd.f32 %v2508, %v2526
          %v2531 = vadd.f32 %v2509, %v2527
          %v2532 = vadd.f32 %v2510, %v2528
          %v2533 = vadd.f32 %v2511, %v2519
          %v2534 = vadd.f32 %v2512, %v2520
          %v2535 = vadd.f32 %v2513, %v2521
          %v2536 = vadd.f32 %v2514, %v2522
          %v2537 = vmul.f32 %v1551, %v2519
          %v2538 = vmul.f32 %v1552, %v2520
          %v2539 = vmul.f32 %v1553, %v2521
          %v2540 = vmul.f32 %v1554, %v2522
          %v2541 = vsub.f32 %v2537, %v2497
          %v2542 = vsub.f32 %v2538, %v2498
          %v2543 = vsub.f32 %v2539, %v2499
          %v2544 = vsub.f32 %v2540, %v2500
          %s2545 = sld [smem:[#allocation4 + $0x2c]]
          %v2546 = vstv %s2545
          %v2547 = vmul.f32 %v2546, %v2541
          %v2548 = vmul.f32 %v2546, %v2542
          %v2549 = vmul.f32 %v2546, %v2543
          %v2550 = vmul.f32 %v2546, %v2544
          %v2551 = vadd.f32 %v2529, %v2547
          %v2552 = vadd.f32 %v2530, %v2548
          %v2553 = vadd.f32 %v2531, %v2549
          %v2554 = vadd.f32 %v2532, %v2550
          %v2555 = vadd.f32 %v2533, %v2541
          %v2556 = vadd.f32 %v2534, %v2542
          %v2557 = vadd.f32 %v2535, %v2543
          %v2558 = vadd.f32 %v2536, %v2544
          %v2559 = vmul.f32 %v1551, %v2541
          %v2560 = vmul.f32 %v1552, %v2542
          %v2561 = vmul.f32 %v1553, %v2543
          %v2562 = vmul.f32 %v1554, %v2544
          %v2563 = vsub.f32 %v2559, %v2519
          %v2564 = vsub.f32 %v2560, %v2520
          %v2565 = vsub.f32 %v2561, %v2521
          %v2566 = vsub.f32 %v2562, %v2522
          %s2567 = sld [smem:[#allocation4 + $0x2d]]
          %v2568 = vstv %s2567
          %v2569 = vmul.f32 %v2568, %v2563
          %v2570 = vmul.f32 %v2568, %v2564
          %v2571 = vmul.f32 %v2568, %v2565
          %v2572 = vmul.f32 %v2568, %v2566
          %v2573 = vadd.f32 %v2551, %v2569
          %v2574 = vadd.f32 %v2552, %v2570
          %v2575 = vadd.f32 %v2553, %v2571
          %v2576 = vadd.f32 %v2554, %v2572
          %v2577 = vadd.f32 %v2555, %v2563
          %v2578 = vadd.f32 %v2556, %v2564
          %v2579 = vadd.f32 %v2557, %v2565
          %v2580 = vadd.f32 %v2558, %v2566
          %v2581 = vmul.f32 %v1551, %v2563
          %v2582 = vmul.f32 %v1552, %v2564
          %v2583 = vmul.f32 %v1553, %v2565
          %v2584 = vmul.f32 %v1554, %v2566
          %v2585 = vsub.f32 %v2581, %v2541
          %v2586 = vsub.f32 %v2582, %v2542
          %v2587 = vsub.f32 %v2583, %v2543
          %v2588 = vsub.f32 %v2584, %v2544
          %s2589 = sld [smem:[#allocation4 + $0x2e]]
          %v2590 = vstv %s2589
          %v2591 = vmul.f32 %v2590, %v2585
          %v2592 = vmul.f32 %v2590, %v2586
          %v2593 = vmul.f32 %v2590, %v2587
          %v2594 = vmul.f32 %v2590, %v2588
          %v2595 = vadd.f32 %v2573, %v2591
          %v2596 = vadd.f32 %v2574, %v2592
          %v2597 = vadd.f32 %v2575, %v2593
          %v2598 = vadd.f32 %v2576, %v2594
          %v2599 = vadd.f32 %v2577, %v2585
          %v2600 = vadd.f32 %v2578, %v2586
          %v2601 = vadd.f32 %v2579, %v2587
          %v2602 = vadd.f32 %v2580, %v2588
          %v2603 = vmul.f32 %v1551, %v2585
          %v2604 = vmul.f32 %v1552, %v2586
          %v2605 = vmul.f32 %v1553, %v2587
          %v2606 = vmul.f32 %v1554, %v2588
          %v2607 = vsub.f32 %v2603, %v2563
          %v2608 = vsub.f32 %v2604, %v2564
          %v2609 = vsub.f32 %v2605, %v2565
          %v2610 = vsub.f32 %v2606, %v2566
          %s2611 = sld [smem:[#allocation4 + $0x2f]]
          %v2612 = vstv %s2611
          %v2613 = vmul.f32 %v2612, %v2607
          %v2614 = vmul.f32 %v2612, %v2608
          %v2615 = vmul.f32 %v2612, %v2609
          %v2616 = vmul.f32 %v2612, %v2610
          %v2617 = vadd.f32 %v2595, %v2613
          %v2618 = vadd.f32 %v2596, %v2614
          %v2619 = vadd.f32 %v2597, %v2615
          %v2620 = vadd.f32 %v2598, %v2616
          %v2621 = vadd.f32 %v2599, %v2607
          %v2622 = vadd.f32 %v2600, %v2608
          %v2623 = vadd.f32 %v2601, %v2609
          %v2624 = vadd.f32 %v2602, %v2610
          %v2625 = vmul.f32 %v1551, %v2607
          %v2626 = vmul.f32 %v1552, %v2608
          %v2627 = vmul.f32 %v1553, %v2609
          %v2628 = vmul.f32 %v1554, %v2610
          %v2629 = vsub.f32 %v2625, %v2585
          %v2630 = vsub.f32 %v2626, %v2586
          %v2631 = vsub.f32 %v2627, %v2587
          %v2632 = vsub.f32 %v2628, %v2588
          %s2633 = sld [smem:[#allocation4 + $0x30]]
          %v2634 = vstv %s2633
          %v2635 = vmul.f32 %v2634, %v2629
          %v2636 = vmul.f32 %v2634, %v2630
          %v2637 = vmul.f32 %v2634, %v2631
          %v2638 = vmul.f32 %v2634, %v2632
          %v2639 = vadd.f32 %v2617, %v2635
          %v2640 = vadd.f32 %v2618, %v2636
          %v2641 = vadd.f32 %v2619, %v2637
          %v2642 = vadd.f32 %v2620, %v2638
          %v2643 = vadd.f32 %v2621, %v2629
          %v2644 = vadd.f32 %v2622, %v2630
          %v2645 = vadd.f32 %v2623, %v2631
          %v2646 = vadd.f32 %v2624, %v2632
          %v2647 = vmul.f32 %v1551, %v2629
          %v2648 = vmul.f32 %v1552, %v2630
          %v2649 = vmul.f32 %v1553, %v2631
          %v2650 = vmul.f32 %v1554, %v2632
          %v2651 = vsub.f32 %v2647, %v2607
          %v2652 = vsub.f32 %v2648, %v2608
          %v2653 = vsub.f32 %v2649, %v2609
          %v2654 = vsub.f32 %v2650, %v2610
          %s2655 = sld [smem:[#allocation4 + $0x31]]
          %v2656 = vstv %s2655
          %v2657 = vmul.f32 %v2656, %v2651
          %v2658 = vmul.f32 %v2656, %v2652
          %v2659 = vmul.f32 %v2656, %v2653
          %v2660 = vmul.f32 %v2656, %v2654
          %v2661 = vadd.f32 %v2639, %v2657
          %v2662 = vadd.f32 %v2640, %v2658
          %v2663 = vadd.f32 %v2641, %v2659
          %v2664 = vadd.f32 %v2642, %v2660
          %v2665 = vadd.f32 %v2643, %v2651
          %v2666 = vadd.f32 %v2644, %v2652
          %v2667 = vadd.f32 %v2645, %v2653
          %v2668 = vadd.f32 %v2646, %v2654
          %v2669 = vmul.f32 %v1582, %v2661
          %v2670 = vmul.f32 %v1584, %v2662
          %v2671 = vmul.f32 %v1586, %v2663
          %v2672 = vmul.f32 %v1588, %v2664
          %v2673 = vmul.f32 %v2665, 1e-08
          %v2674 = vmul.f32 %v2666, 1e-08
          %v2675 = vmul.f32 %v2667, 1e-08
          %v2676 = vmul.f32 %v2668, 1e-08
          %v2677 = vadd.f32 %v2669, %v2673
          %v2678 = vadd.f32 %v2670, %v2674
          %v2679 = vadd.f32 %v2671, %v2675
          %v2680 = vadd.f32 %v2672, %v2676
          %s2681 = smul.addr %s307, 8
          %s2682 = scalar_lea.vmem %s298, %s2681
          %2683 = vst [vmem:[%s2682] sm:$0xff] %v2677
          %2684 = vst [vmem:[%s2682 + $0x8] sm:$0xff] %v2678
          %2685 = vst [vmem:[%s2682 + $0x10] sm:$0xff] %v2679
          %2686 = vst [vmem:[%s2682 + $0x18] sm:$0xff] %v2680
        $region49: #{drone_noise_gen.1} parent=35 // loop_footer
          %s305 = sadd.s32 1, %s301
        $region50: #{drone_noise_gen.1} parent=35 // loop_footer_branch
          %300 = sbr.rel target = $region46
        $region51: #{drone_noise_gen.1} parent=35 // loop_exit
          _
        %s2687 = smul.u32 16, %s22
        %p2688 = scmp.lt.s32.totalorder %s21, 0
        %s2689 = scalar_select %p2688, %s21, 0
        %p2690 = scmp.lt.s32.totalorder %s2687, 31
        %s2691 = scalar_select %p2690, %s2687, 31
        %s2692 = smul.addr %s2689, 32
        %s2693 = sadd.s32 %s2691, %s2692
        %s2694 = smul.addr %s2693, 8
        %s2695 = scalar_lea.vmem %s4, %s2694
        // Predicated region
        $region52: #{drone_noise_gen.1} parent=35 // pred_check
          %p2696 = pneg %p147
        $region53: #{drone_noise_gen.1} parent=35 // pred_check_branch
          %2698 = sbr.rel (%p2696) target = $region55
        $region54: #{drone_noise_gen.1} parent=35 // pred_region
          %s2699 = smul.u32 16, %s22
        $region55: #{drone_noise_gen.1} parent=35 // pred_fallthru
          _
      $region36: #{drone_noise_gen.1} parent=5 // pred_fallthru
        _
      %p2700 = scmp.le.s32.totalorder 2, %s12
      // Predicated region
      $region56: #{drone_noise_gen.1} parent=5 // pred_check
        %p2701 = pneg %p2700
      $region57: #{drone_noise_gen.1} parent=5 // pred_check_branch
        %2703 = sbr.rel (%p2701) target = $region59
      $region58: #{drone_noise_gen.1} parent=5 // pred_region
        %s2704 = ssub.s32 %s12, 2
        // Predicated region
        $region60: #{drone_noise_gen.1} parent=58 // pred_check
          %p2705 = pneg %p153
        $region61: #{drone_noise_gen.1} parent=58 // pred_check_branch
          %2707 = sbr.rel (%p2705) target = $region63
        $region62: #{drone_noise_gen.1} parent=58 // pred_region
          %s2708 = smul.u32 16, %s24
          %p2709 = scmp.lt.s32.totalorder %s23, 0
          %s2710 = scalar_select %p2709, %s23, 0
          %p2711 = scmp.lt.s32.totalorder %s2708, 31
          %s2712 = scalar_select %p2711, %s2708, 31
          %s2713 = smul.addr %s2710, 32
          %s2714 = sadd.s32 %s2712, %s2713
          %s2715 = smul.addr %s2714, 8
          %s2716 = scalar_lea.vmem %s4, %s2715
        $region63: #{drone_noise_gen.1} parent=58 // pred_fallthru
          _
      $region59: #{drone_noise_gen.1} parent=5 // pred_fallthru
        _
    $region6: #{drone_noise_gen.1} parent=1 // loop_footer
      %s16 = sadd.s32 1, %s12
    $region7: #{drone_noise_gen.1} parent=1 // loop_footer_branch
      %11 = sbr.rel target = $region3
    $region8: #{drone_noise_gen.1} parent=1 // loop_exit
      _
    %2717 = vsyncpa [#allocation3], 1
    %s2718 = scalar_lea.sflag [#allocation3], 1
    %2719 = vsyncpa %s2718, 1
    %2720 = vsyncpa [#allocation5], 1

</llo_original>
